<compile_context>
chip_gen: v7x
topology: tpu7x:2x2x1
jax: 0.10.0
libtpu: 0.0.40
codegen_flags: <defaults>
</compile_context>

<pallas_src>
import functools

import jax
import jax.numpy as jnp
from jax.experimental import pallas as pl
from jax.experimental.pallas import tpu as pltpu


def _round_up(x, m):
    return (x + m - 1) // m * m


def _vmem_capacity_bytes():
    """Per-core VMEM capacity, queried from hardware with a safe fallback."""
    try:
        return int(pltpu.get_tpu_info().vmem_capacity_bytes)
    except Exception:
        return 64 * 1024 * 1024  # conservative (v7x-sized) fallback


def _vmem_limit_bytes():
    # Leave headroom below physical capacity.
    return min(int(0.75 * _vmem_capacity_bytes()), 100 * 1024 * 1024)


# ---------------------------------------------------------------------------
# Path 1: whole-network fusion (single pallas_call) for small/medium graphs.
# ---------------------------------------------------------------------------
def _sage_fused_kernel(*refs, n_layers):
    # refs = (a, x, [w_self, w_neigh, bias] * n_layers, out)
    a_ref, x_ref = refs[0], refs[1]
    o_ref = refs[2 + 3 * n_layers]

    a = a_ref[...]        # (N, N)       bf16, row-normalized adjacency
    h = x_ref[...]        # (N, F0_pad)  bf16
    for l in range(n_layers):
        ws = refs[2 + 3 * l][...]   # (Fi_pad, Fo_pad) bf16
        wn = refs[3 + 3 * l][...]   # (Fi_pad, Fo_pad) bf16
        b = refs[4 + 3 * l][...]    # (1, Fo_pad)      f32
        # h_neigh = A_mean @ h  (bf16 MXU inputs, f32 accumulation)
        neigh = jnp.dot(a, h, preferred_element_type=jnp.float32)
        out = (jnp.dot(h, ws, preferred_element_type=jnp.float32)
               + jnp.dot(neigh.astype(jnp.bfloat16), wn,
                         preferred_element_type=jnp.float32)
               + b)
        if l != n_layers - 1:
            h = jnp.maximum(out, 0.0).astype(jnp.bfloat16)
        else:
            o_ref[...] = out.astype(o_ref.dtype)


def sage_fused_forward(a_bf16, x_bf16, padded_params):
    n_pad = x_bf16.shape[0]
    n_layers = len(padded_params)
    f_out_pad = padded_params[-1][0].shape[1]

    operands = [a_bf16, x_bf16]
    in_specs = [pl.BlockSpec(a_bf16.shape, lambda i: (0, 0)),
                pl.BlockSpec(x_bf16.shape, lambda i: (0, 0))]
    for (ws, wn, b) in padded_params:
        operands += [ws, wn, b]
        in_specs += [pl.BlockSpec(ws.shape, lambda i: (0, 0)),
                     pl.BlockSpec(wn.shape, lambda i: (0, 0)),
                     pl.BlockSpec(b.shape, lambda i: (0, 0))]

    kernel = functools.partial(_sage_fused_kernel, n_layers=n_layers)
    return pl.pallas_call(
        kernel,
        out_shape=jax.ShapeDtypeStruct((n_pad, f_out_pad), jnp.float32),
        grid_spec=pltpu.PrefetchScalarGridSpec(
            num_scalar_prefetch=0,
            grid=(1,),
            in_specs=in_specs,
            out_specs=pl.BlockSpec((n_pad, f_out_pad), lambda i: (0, 0)),
        ),
        compiler_params=pltpu.CompilerParams(
            dimension_semantics=("arbitrary",),
            vmem_limit_bytes=_vmem_limit_bytes(),
        ),
    )(*operands)


# ---------------------------------------------------------------------------
# Path 2: per-layer tiled kernel (resident H, row-tiled A strips).
# ---------------------------------------------------------------------------
def _sage_layer_kernel(a_ref, h_ref, ws_ref, wn_ref, b_ref, o_ref, *scratch,
                       apply_relu, row_tile, k_chunk, n_k):
    # a_ref: (row_tile, k_chunk) bf16   A_mean[i-tile, k-chunk]
    # h_ref: (n_pad, f_in_pad)  bf16    resident for the whole layer
    # ws/wn: (f_in_pad, f_out_pad) bf16, b: (1, f_out_pad) f32
    i = pl.program_id(0)
    self_rows = pl.ds(pl.multiple_of(i * row_tile, row_tile), row_tile)

    def project(neigh_f32):
        out = (jnp.dot(h_ref[self_rows, :], ws_ref[...],
                       preferred_element_type=jnp.float32)
               + jnp.dot(neigh_f32.astype(jnp.bfloat16), wn_ref[...],
                         preferred_element_type=jnp.float32)
               + b_ref[...])
        if apply_relu:
            out = jnp.maximum(out, 0.0)
        o_ref[...] = out.astype(o_ref.dtype)

    if n_k == 1:
        # K collapsed into the block: one dot, no accumulator RMW, no pl.when.
        neigh = jnp.dot(a_ref[...], h_ref[...],
                        preferred_element_type=jnp.float32)
        project(neigh)
    else:
        acc_ref = scratch[0]
        k = pl.program_id(1)

        @pl.when(k == 0)
        def _init():
            acc_ref[...] = jnp.zeros_like(acc_ref)

        h_chunk = h_ref[pl.ds(pl.multiple_of(k * k_chunk, k_chunk), k_chunk), :]
        acc_ref[...] += jnp.dot(a_ref[...], h_chunk,
                                preferred_element_type=jnp.float32)

        @pl.when(k == n_k - 1)
        def _finalize():
            project(acc_ref[...])


def _choose_k_chunk(n_pad, row_tile, cap_bytes):
    """Largest multiple of row_tile dividing n_pad whose A block fits cap."""
    best = row_tile
    c = row_tile
    while c <= n_pad:
        if n_pad % c == 0 and row_tile * c * 2 <= cap_bytes:
            best = c
        c += row_tile
    return best


def sage_conv_layer(a_bf16, h_bf16, ws, wn, b, *, apply_relu, out_dtype,
                    k_chunk_cap_bytes=8 * 1024 * 1024):
    """One SAGEConv('mean') layer on padded/bf16 operands."""
    n_pad, f_in_pad = h_bf16.shape
    f_out_pad = ws.shape[1]
    assert a_bf16.shape == (n_pad, n_pad)

    # 256-row tiles match the v6e/v7x MXU and amortize per-step grid overhead,
    # but keep >=2 row tiles so the "parallel" axis can feed both v7x cores.
    row_tile = 256 if (n_pad % 256 == 0 and n_pad >= 512) else 128
    assert n_pad % row_tile == 0
    num_row_tiles = n_pad // row_tile

    budget = _vmem_capacity_bytes()
    if 2 * n_pad * f_in_pad * 2 > 0.5 * budget:
        # TODO(synk): K-streamed H variant for graphs whose features exceed VMEM.
        raise NotImplementedError("resident-H layer does not fit VMEM budget")

    k_chunk = _choose_k_chunk(n_pad, row_tile, k_chunk_cap_bytes)
    n_k = n_pad // k_chunk

    kernel = functools.partial(_sage_layer_kernel, apply_relu=apply_relu,
                               row_tile=row_tile, k_chunk=k_chunk, n_k=n_k)
    scratch_shapes = [] if n_k == 1 else [pltpu.VMEM((row_tile, f_in_pad),
                                                     jnp.float32)]
    return pl.pallas_call(
        kernel,
        out_shape=jax.ShapeDtypeStruct((n_pad, f_out_pad), out_dtype),
        grid_spec=pltpu.PrefetchScalarGridSpec(
            num_scalar_prefetch=0,
            grid=(num_row_tiles, n_k),
            in_specs=[
                pl.BlockSpec((row_tile, k_chunk), lambda i, k: (i, k)),    # A
                pl.BlockSpec((n_pad, f_in_pad), lambda i, k: (0, 0)),      # H (resident)
                pl.BlockSpec((f_in_pad, f_out_pad), lambda i, k: (0, 0)),  # W_self
                pl.BlockSpec((f_in_pad, f_out_pad), lambda i, k: (0, 0)),  # W_neigh
                pl.BlockSpec((1, f_out_pad), lambda i, k: (0, 0)),         # bias
            ],
            out_specs=pl.BlockSpec((row_tile, f_out_pad), lambda i, k: (i, 0)),
            scratch_shapes=scratch_shapes,
        ),
        compiler_params=pltpu.CompilerParams(
            dimension_semantics=("parallel", "arbitrary"),
            vmem_limit_bytes=_vmem_limit_bytes(),
        ),
    )(a_bf16, h_bf16, ws, wn, b)


# ---------------------------------------------------------------------------
# Wrappers
# ---------------------------------------------------------------------------
def prepare_adjacency(a_mean, *, pad_to=128):
    """Pad (zero rows/cols) and bf16-cast the adjacency ONCE (hoisted).

    Zero padded columns keep real-node aggregation exact.
    """
    n = a_mean.shape[0]
    n_pad = _round_up(n, pad_to)
    a = jnp.zeros((n_pad, n_pad), jnp.float32).at[:n, :n].set(a_mean)
    return a.astype(jnp.bfloat16)


def _pad_params(params):
    padded = []
    for (w_self, w_neigh, bias) in params:
        f_in, f_out = w_self.shape
        fi, fo = _round_up(f_in, 128), _round_up(f_out, 128)
        ws = jnp.zeros((fi, fo), jnp.float32).at[:f_in, :f_out].set(w_self)
        wn = jnp.zeros((fi, fo), jnp.float32).at[:f_in, :f_out].set(w_neigh)
        b = jnp.zeros((1, fo), jnp.float32).at[0, :f_out].set(bias)
        padded.append((ws.astype(jnp.bfloat16), wn.astype(jnp.bfloat16), b))
    return padded


def _fused_fits_vmem(n_pad, f_pads, w_bytes, budget):
    f_max = max(f_pads)
    a_b = n_pad * n_pad * 2
    x_b = n_pad * f_pads[0] * 2
    out_b = n_pad * f_pads[-1] * 4
    interm_b = 3 * n_pad * f_max * 4          # neigh / out / h temporaries
    need = 2 * (a_b + x_b + w_bytes + out_b) + interm_b
    return need <= 0.4 * budget


def sage_forward(a_bf16, x, params, *, force_tiled=False,
                 k_chunk_cap_bytes=8 * 1024 * 1024):
    """3-layer SAGE forward.  Dropout is identity (inference mode)."""
    n_pad = a_bf16.shape[0]
    n_nodes, f_in0 = x.shape
    assert n_pad % 128 == 0 and n_pad >= n_nodes
    n_classes = params[-1][0].shape[1]
    n_layers = len(params)

    padded = _pad_params(params)
    f_pads = [padded[0][0].shape[0]] + [p[0].shape[1] for p in padded]
    w_bytes = sum(ws.size * 2 + wn.size * 2 + b.size * 4 for ws, wn, b in padded)

    h = jnp.zeros((n_pad, f_pads[0]), jnp.float32).at[:n_nodes, :f_in0].set(x)
    h = h.astype(jnp.bfloat16)

    budget = _vmem_capacity_bytes()
    if (not force_tiled) and _fused_fits_vmem(n_pad, f_pads, w_bytes, budget):
        out = sage_fused_forward(a_bf16, h, padded)
    else:
        for l, (ws, wn, b) in enumerate(padded):
            last = l == n_layers - 1
            h = sage_conv_layer(a_bf16, h, ws, wn, b, apply_relu=not last,
                                out_dtype=jnp.float32 if last else jnp.bfloat16,
                                k_chunk_cap_bytes=k_chunk_cap_bytes)
        out = h
    return out[:n_nodes, :n_classes]


def sage_reference(a_mean, x, params):
    """Pure-JAX f32 reference of the same forward pass."""
    h = x
    for l, (w_self, w_neigh, bias) in enumerate(params):
        h = h @ w_self + (a_mean @ h) @ w_neigh + bias
        if l != len(params) - 1:
            h = jnp.maximum(h, 0.0)
    return h


def _init_params(key, in_feats, n_hidden, n_classes):
    """Deterministic Xavier-uniform style init matching DGL SAGEConv shapes."""
    dims = [(in_feats, n_hidden), (n_hidden, n_hidden), (n_hidden, n_classes)]
    params = []
    for (fi, fo) in dims:
        key, k1, k2 = jax.random.split(key, 3)
        limit = (6.0 / (fi + fo)) ** 0.5
        w_self = jax.random.uniform(k1, (fi, fo), jnp.float32, -limit, limit)
        w_neigh = jax.random.uniform(k2, (fi, fo), jnp.float32, -limit, limit)
        bias = jnp.zeros((fo,), jnp.float32)
        params.append((w_self, w_neigh, bias))
    return params


if __name__ == "__main__":
    key = jax.random.PRNGKey(0)

    n_nodes = 256          # multiple of 128 -> >=2 row tiles in the tiled path
    in_feats = 32
    n_hidden = 64
    n_classes = 16

    key, k_adj, k_x = jax.random.split(key, 3)

    # Random sparse-ish directed graph as a dense {0,1} adjacency (no self loops).
    adj = (jax.random.uniform(k_adj, (n_nodes, n_nodes)) < 0.05).astype(jnp.float32)
    adj = adj * (1.0 - jnp.eye(n_nodes, dtype=jnp.float32))
    deg = jnp.clip(jnp.sum(adj, axis=1, keepdims=True), 1.0, None)
    a_mean = adj / deg     # row-normalized: (A_mean @ h)[i] = mean of i's neighbors

    x = jax.random.normal(k_x, (n_nodes, in_feats), jnp.float32)
    params = _init_params(key, in_feats, n_hidden, n_classes)

    # Constant across layers and forward calls: pad + cast A once, outside jit.
    a_bf16 = jax.block_until_ready(prepare_adjacency(a_mean))

    ref = sage_reference(a_mean, x, params)

    # Primary path for this shape: whole-network fusion in one pallas_call.
    out = jax.jit(sage_forward)(a_bf16, x, params)
    out = jax.block_until_ready(out)
    assert out.shape == (n_nodes, n_classes)
    assert jnp.all(jnp.isfinite(out)), "non-finite output (fused)"
    err = float(jnp.max(jnp.abs(out - ref)))
    assert err < 0.15, f"fused path mismatch vs f32 reference: max_err={err}"

    # Secondary path: per-layer tiled kernel (resident H, collapsed K).
    out_t = jax.jit(functools.partial(sage_forward, force_tiled=True))(
        a_bf16, x, params)
    out_t = jax.block_until_ready(out_t)
    err_t = float(jnp.max(jnp.abs(out_t - ref)))
    assert err_t < 0.15, f"tiled path mismatch vs f32 reference: max_err={err_t}"

    # Tertiary: force K-chunked accumulation (n_k > 1) for coverage.
    out_k = jax.jit(functools.partial(sage_forward, force_tiled=True,
                                      k_chunk_cap_bytes=1))(a_bf16, x, params)
    out_k = jax.block_until_ready(out_k)
    err_k = float(jnp.max(jnp.abs(out_k - ref)))
    assert err_k < 0.15, f"k-chunked path mismatch vs f32 ref: max_err={err_k}"

    print("KERNEL_OK")
</pallas_src>

<mosaic_0001>
module attributes {stable_mosaic.version = 11 : i64} {
  func.func @_sage_fused_kernel(%arg0: i32, %arg1: memref<256x256xbf16, #tpu.memory_space<vmem>>, %arg2: memref<256x128xbf16, #tpu.memory_space<vmem>>, %arg3: memref<128x128xbf16, #tpu.memory_space<vmem>>, %arg4: memref<128x128xbf16, #tpu.memory_space<vmem>>, %arg5: memref<1x128xf32, #tpu.memory_space<vmem>>, %arg6: memref<128x128xbf16, #tpu.memory_space<vmem>>, %arg7: memref<128x128xbf16, #tpu.memory_space<vmem>>, %arg8: memref<1x128xf32, #tpu.memory_space<vmem>>, %arg9: memref<128x128xbf16, #tpu.memory_space<vmem>>, %arg10: memref<128x128xbf16, #tpu.memory_space<vmem>>, %arg11: memref<1x128xf32, #tpu.memory_space<vmem>>, %arg12: memref<256x128xf32, #tpu.memory_space<vmem>>) attributes {dimension_semantics = [#tpu.dimension_semantics<arbitrary>], iteration_bounds = array<i64: 1>, scalar_prefetch = 0 : i64, scratch_operands = 0 : i64, tpu.core_type = #tpu.core_type<tc>, window_params = [{pipeline_mode = #tpu.pipeline_mode<synchronous>, transform_indices = @transform_0, window_bounds = array<i64: 256, 256>}, {pipeline_mode = #tpu.pipeline_mode<synchronous>, transform_indices = @transform_1, window_bounds = array<i64: 256, 128>}, {pipeline_mode = #tpu.pipeline_mode<synchronous>, transform_indices = @transform_2, window_bounds = array<i64: 128, 128>}, {pipeline_mode = #tpu.pipeline_mode<synchronous>, transform_indices = @transform_3, window_bounds = array<i64: 128, 128>}, {pipeline_mode = #tpu.pipeline_mode<synchronous>, transform_indices = @transform_4, window_bounds = array<i64: 1, 128>}, {pipeline_mode = #tpu.pipeline_mode<synchronous>, transform_indices = @transform_5, window_bounds = array<i64: 128, 128>}, {pipeline_mode = #tpu.pipeline_mode<synchronous>, transform_indices = @transform_6, window_bounds = array<i64: 128, 128>}, {pipeline_mode = #tpu.pipeline_mode<synchronous>, transform_indices = @transform_7, window_bounds = array<i64: 1, 128>}, {pipeline_mode = #tpu.pipeline_mode<synchronous>, transform_indices = @transform_8, window_bounds = array<i64: 128, 128>}, {pipeline_mode = #tpu.pipeline_mode<synchronous>, transform_indices = @transform_9, window_bounds = array<i64: 128, 128>}, {pipeline_mode = #tpu.pipeline_mode<synchronous>, transform_indices = @transform_10, window_bounds = array<i64: 1, 128>}, {pipeline_mode = #tpu.pipeline_mode<synchronous>, transform_indices = @transform_11, window_bounds = array<i64: 256, 128>}]} {
    %c0 = arith.constant 0 : index
    %c0_0 = arith.constant 0 : index
    %0 = vector.load %arg1[%c0, %c0_0] : memref<256x256xbf16, #tpu.memory_space<vmem>>, vector<256x256xbf16>
    %c0_1 = arith.constant 0 : index
    %c0_2 = arith.constant 0 : index
    %1 = vector.load %arg2[%c0_1, %c0_2] : memref<256x128xbf16, #tpu.memory_space<vmem>>, vector<256x128xbf16>
    %c0_3 = arith.constant 0 : index
    %c0_4 = arith.constant 0 : index
    %2 = vector.load %arg3[%c0_3, %c0_4] : memref<128x128xbf16, #tpu.memory_space<vmem>>, vector<128x128xbf16>
    %c0_5 = arith.constant 0 : index
    %c0_6 = arith.constant 0 : index
    %3 = vector.load %arg4[%c0_5, %c0_6] : memref<128x128xbf16, #tpu.memory_space<vmem>>, vector<128x128xbf16>
    %c0_7 = arith.constant 0 : index
    %c0_8 = arith.constant 0 : index
    %4 = vector.load %arg5[%c0_7, %c0_8] : memref<1x128xf32, #tpu.memory_space<vmem>>, vector<1x128xf32>
    %cst = arith.constant dense<0.000000e+00> : vector<256x128xf32>
    %5 = tpu.matmul %0, %1, %cst {dimension_numbers = #tpu.dot_dimension_numbers<[1], [0], [0], [1], [0, 0, 1, 1], [], []>} : vector<256x256xbf16>, vector<256x128xbf16>, vector<256x128xf32> -> vector<256x128xf32>
    %cst_9 = arith.constant dense<0.000000e+00> : vector<256x128xf32>
    %6 = tpu.matmul %1, %2, %cst_9 {dimension_numbers = #tpu.dot_dimension_numbers<[1], [0], [0], [1], [0, 0, 1, 1], [], []>} : vector<256x128xbf16>, vector<128x128xbf16>, vector<256x128xf32> -> vector<256x128xf32>
    %7 = arith.truncf %5 : vector<256x128xf32> to vector<256x128xbf16>
    %cst_10 = arith.constant dense<0.000000e+00> : vector<256x128xf32>
    %8 = tpu.matmul %7, %3, %cst_10 {dimension_numbers = #tpu.dot_dimension_numbers<[1], [0], [0], [1], [0, 0, 1, 1], [], []>} : vector<256x128xbf16>, vector<128x128xbf16>, vector<256x128xf32> -> vector<256x128xf32>
    %9 = arith.addf %6, %8 : vector<256x128xf32>
    %10 = vector.broadcast %4 : vector<1x128xf32> to vector<256x128xf32>
    %11 = arith.addf %9, %10 : vector<256x128xf32>
    %cst_11 = arith.constant 0.000000e+00 : f32
    %12 = vector.broadcast %cst_11 : f32 to vector<256x128xf32>
    %13 = arith.maximumf %11, %12 : vector<256x128xf32>
    %14 = arith.truncf %13 : vector<256x128xf32> to vector<256x128xbf16>
    %c0_12 = arith.constant 0 : index
    %c0_13 = arith.constant 0 : index
    %15 = vector.load %arg6[%c0_12, %c0_13] : memref<128x128xbf16, #tpu.memory_space<vmem>>, vector<128x128xbf16>
    %c0_14 = arith.constant 0 : index
    %c0_15 = arith.constant 0 : index
    %16 = vector.load %arg7[%c0_14, %c0_15] : memref<128x128xbf16, #tpu.memory_space<vmem>>, vector<128x128xbf16>
    %c0_16 = arith.constant 0 : index
    %c0_17 = arith.constant 0 : index
    %17 = vector.load %arg8[%c0_16, %c0_17] : memref<1x128xf32, #tpu.memory_space<vmem>>, vector<1x128xf32>
    %cst_18 = arith.constant dense<0.000000e+00> : vector<256x128xf32>
    %18 = tpu.matmul %0, %14, %cst_18 {dimension_numbers = #tpu.dot_dimension_numbers<[1], [0], [0], [1], [0, 0, 1, 1], [], []>} : vector<256x256xbf16>, vector<256x128xbf16>, vector<256x128xf32> -> vector<256x128xf32>
    %cst_19 = arith.constant dense<0.000000e+00> : vector<256x128xf32>
    %19 = tpu.matmul %14, %15, %cst_19 {dimension_numbers = #tpu.dot_dimension_numbers<[1], [0], [0], [1], [0, 0, 1, 1], [], []>} : vector<256x128xbf16>, vector<128x128xbf16>, vector<256x128xf32> -> vector<256x128xf32>
    %20 = arith.truncf %18 : vector<256x128xf32> to vector<256x128xbf16>
    %cst_20 = arith.constant dense<0.000000e+00> : vector<256x128xf32>
    %21 = tpu.matmul %20, %16, %cst_20 {dimension_numbers = #tpu.dot_dimension_numbers<[1], [0], [0], [1], [0, 0, 1, 1], [], []>} : vector<256x128xbf16>, vector<128x128xbf16>, vector<256x128xf32> -> vector<256x128xf32>
    %22 = arith.addf %19, %21 : vector<256x128xf32>
    %23 = vector.broadcast %17 : vector<1x128xf32> to vector<256x128xf32>
    %24 = arith.addf %22, %23 : vector<256x128xf32>
    %cst_21 = arith.constant 0.000000e+00 : f32
    %25 = vector.broadcast %cst_21 : f32 to vector<256x128xf32>
    %26 = arith.maximumf %24, %25 : vector<256x128xf32>
    %27 = arith.truncf %26 : vector<256x128xf32> to vector<256x128xbf16>
    %c0_22 = arith.constant 0 : index
    %c0_23 = arith.constant 0 : index
    %28 = vector.load %arg9[%c0_22, %c0_23] : memref<128x128xbf16, #tpu.memory_space<vmem>>, vector<128x128xbf16>
    %c0_24 = arith.constant 0 : index
    %c0_25 = arith.constant 0 : index
    %29 = vector.load %arg10[%c0_24, %c0_25] : memref<128x128xbf16, #tpu.memory_space<vmem>>, vector<128x128xbf16>
    %c0_26 = arith.constant 0 : index
    %c0_27 = arith.constant 0 : index
    %30 = vector.load %arg11[%c0_26, %c0_27] : memref<1x128xf32, #tpu.memory_space<vmem>>, vector<1x128xf32>
    %cst_28 = arith.constant dense<0.000000e+00> : vector<256x128xf32>
    %31 = tpu.matmul %0, %27, %cst_28 {dimension_numbers = #tpu.dot_dimension_numbers<[1], [0], [0], [1], [0, 0, 1, 1], [], []>} : vector<256x256xbf16>, vector<256x128xbf16>, vector<256x128xf32> -> vector<256x128xf32>
    %cst_29 = arith.constant dense<0.000000e+00> : vector<256x128xf32>
    %32 = tpu.matmul %27, %28, %cst_29 {dimension_numbers = #tpu.dot_dimension_numbers<[1], [0], [0], [1], [0, 0, 1, 1], [], []>} : vector<256x128xbf16>, vector<128x128xbf16>, vector<256x128xf32> -> vector<256x128xf32>
    %33 = arith.truncf %31 : vector<256x128xf32> to vector<256x128xbf16>
    %cst_30 = arith.constant dense<0.000000e+00> : vector<256x128xf32>
    %34 = tpu.matmul %33, %29, %cst_30 {dimension_numbers = #tpu.dot_dimension_numbers<[1], [0], [0], [1], [0, 0, 1, 1], [], []>} : vector<256x128xbf16>, vector<128x128xbf16>, vector<256x128xf32> -> vector<256x128xf32>
    %35 = arith.addf %32, %34 : vector<256x128xf32>
    %36 = vector.broadcast %30 : vector<1x128xf32> to vector<256x128xf32>
    %37 = arith.addf %35, %36 : vector<256x128xf32>
    %c0_31 = arith.constant 0 : index
    %c0_32 = arith.constant 0 : index
    %38 = vector.load %arg12[%c0_31, %c0_32] : memref<256x128xf32, #tpu.memory_space<vmem>>, vector<256x128xf32>
    tpu.vector_store %arg12[%c0_31, %c0_32], %37 {strides = array<i32>} : memref<256x128xf32, #tpu.memory_space<vmem>>, vector<256x128xf32>,
    return
  }
  func.func @transform_0(%arg0: i32) -> (i32, i32) {
    %c0_i32 = arith.constant 0 : i32
    %c0_i32_0 = arith.constant 0 : i32
    %c0_i32_1 = arith.constant 0 : i32
    return %c0_i32, %c0_i32_0 : i32, i32
  }
  func.func @transform_1(%arg0: i32) -> (i32, i32) {
    %c0_i32 = arith.constant 0 : i32
    %c0_i32_0 = arith.constant 0 : i32
    %c0_i32_1 = arith.constant 0 : i32
    return %c0_i32, %c0_i32_0 : i32, i32
  }
  func.func @transform_2(%arg0: i32) -> (i32, i32) {
    %c0_i32 = arith.constant 0 : i32
    %c0_i32_0 = arith.constant 0 : i32
    %c0_i32_1 = arith.constant 0 : i32
    return %c0_i32, %c0_i32_0 : i32, i32
  }
  func.func @transform_3(%arg0: i32) -> (i32, i32) {
    %c0_i32 = arith.constant 0 : i32
    %c0_i32_0 = arith.constant 0 : i32
    %c0_i32_1 = arith.constant 0 : i32
    return %c0_i32, %c0_i32_0 : i32, i32
  }
  func.func @transform_4(%arg0: i32) -> (i32, i32) {
    %c0_i32 = arith.constant 0 : i32
    %c0_i32_0 = arith.constant 0 : i32
    %c0_i32_1 = arith.constant 0 : i32
    return %c0_i32, %c0_i32_0 : i32, i32
  }
  func.func @transform_5(%arg0: i32) -> (i32, i32) {
    %c0_i32 = arith.constant 0 : i32
    %c0_i32_0 = arith.constant 0 : i32
    %c0_i32_1 = arith.constant 0 : i32
    return %c0_i32, %c0_i32_0 : i32, i32
  }
  func.func @transform_6(%arg0: i32) -> (i32, i32) {
    %c0_i32 = arith.constant 0 : i32
    %c0_i32_0 = arith.constant 0 : i32
    %c0_i32_1 = arith.constant 0 : i32
    return %c0_i32, %c0_i32_0 : i32, i32
  }
  func.func @transform_7(%arg0: i32) -> (i32, i32) {
    %c0_i32 = arith.constant 0 : i32
    %c0_i32_0 = arith.constant 0 : i32
    %c0_i32_1 = arith.constant 0 : i32
    return %c0_i32, %c0_i32_0 : i32, i32
  }
  func.func @transform_8(%arg0: i32) -> (i32, i32) {
    %c0_i32 = arith.constant 0 : i32
    %c0_i32_0 = arith.constant 0 : i32
    %c0_i32_1 = arith.constant 0 : i32
    return %c0_i32, %c0_i32_0 : i32, i32
  }
  func.func @transform_9(%arg0: i32) -> (i32, i32) {
    %c0_i32 = arith.constant 0 : i32
    %c0_i32_0 = arith.constant 0 : i32
    %c0_i32_1 = arith.constant 0 : i32
    return %c0_i32, %c0_i32_0 : i32, i32
  }
  func.func @transform_10(%arg0: i32) -> (i32, i32) {
    %c0_i32 = arith.constant 0 : i32
    %c0_i32_0 = arith.constant 0 : i32
    %c0_i32_1 = arith.constant 0 : i32
    return %c0_i32, %c0_i32_0 : i32, i32
  }
  func.func @transform_11(%arg0: i32) -> (i32, i32) {
    %c0_i32 = arith.constant 0 : i32
    %c0_i32_0 = arith.constant 0 : i32
    %c0_i32_1 = arith.constant 0 : i32
    return %c0_i32, %c0_i32_0 : i32, i32
  }
}

</mosaic_0001>

<llo_original>
// kernel: sage_forward.1
$region0: #{sage_forward.1}
  #allocation0 [shape = 'u32[]', space=smem, size = 0x4, offset = 0x4, fixed_abs, tag = 'smem constant byte address 0x4 - core index']
  #allocation1 [shape = 'u32[144,128]{1,0:T(1,128)}', space=vmem, size = 0x12000, scoped, tag = 'internal scratch']
  %s0 = inlined_call_operand.vmem [shape: bf16[256,256], index: 0, kind: input, shape index: {}]
  %s1 = inlined_call_operand.vmem [shape: bf16[256,128], index: 1, kind: input, shape index: {}]
  %s2 = inlined_call_operand.vmem [shape: bf16[128,128], index: 2, kind: input, shape index: {}]
  %s3 = inlined_call_operand.vmem [shape: bf16[128,128], index: 3, kind: input, shape index: {}]
  %s4 = inlined_call_operand.vmem [shape: f32[1,128], index: 4, kind: input, shape index: {}]
  %s5 = inlined_call_operand.vmem [shape: bf16[128,128], index: 5, kind: input, shape index: {}]
  %s6 = inlined_call_operand.vmem [shape: bf16[128,128], index: 6, kind: input, shape index: {}]
  %s7 = inlined_call_operand.vmem [shape: f32[1,128], index: 7, kind: input, shape index: {}]
  %s8 = inlined_call_operand.vmem [shape: bf16[128,128], index: 8, kind: input, shape index: {}]
  %s9 = inlined_call_operand.vmem [shape: bf16[128,128], index: 9, kind: input, shape index: {}]
  %s10 = inlined_call_operand.vmem [shape: f32[1,128], index: 10, kind: input, shape index: {}]
  %s11 = inlined_call_operand.vmem [shape: f32[256,128], index: 11, kind: output, shape index: {}]
  %s12 = sld [smem:[#allocation0]]
  $region54: #{sage_forward.1} parent=0
    _
  %s14 = ssub.s32 1, %s12
  %s15 = scalar_select 0, %s14, %s12
  // Predicated region
  $region2: #{sage_forward.1} parent=0 // pred_check
    _
  $region3: #{sage_forward.1} parent=0 // pred_check_branch
    %17 = sbr.rel (0) target = $region5
  $region4: #{sage_forward.1} parent=0 // pred_region
    _
  $region5: #{sage_forward.1} parent=0 // pred_fallthru
    _
  // Predicated region
  $region6: #{sage_forward.1} parent=0 // pred_check
    _
  $region7: #{sage_forward.1} parent=0 // pred_check_branch
    %19 = sbr.rel (0) target = $region9
  $region8: #{sage_forward.1} parent=0 // pred_region
    _
  $region9: #{sage_forward.1} parent=0 // pred_fallthru
    _
  // Predicated region
  $region10: #{sage_forward.1} parent=0 // pred_check
    _
  $region11: #{sage_forward.1} parent=0 // pred_check_branch
    %21 = sbr.rel (0) target = $region13
  $region12: #{sage_forward.1} parent=0 // pred_region
    _
  $region13: #{sage_forward.1} parent=0 // pred_fallthru
    _
  // Predicated region
  $region14: #{sage_forward.1} parent=0 // pred_check
    _
  $region15: #{sage_forward.1} parent=0 // pred_check_branch
    %23 = sbr.rel (0) target = $region17
  $region16: #{sage_forward.1} parent=0 // pred_region
    _
  $region17: #{sage_forward.1} parent=0 // pred_fallthru
    _
  // Predicated region
  $region18: #{sage_forward.1} parent=0 // pred_check
    _
  $region19: #{sage_forward.1} parent=0 // pred_check_branch
    %25 = sbr.rel (0) target = $region21
  $region20: #{sage_forward.1} parent=0 // pred_region
    _
  $region21: #{sage_forward.1} parent=0 // pred_fallthru
    _
  // Predicated region
  $region22: #{sage_forward.1} parent=0 // pred_check
    _
  $region23: #{sage_forward.1} parent=0 // pred_check_branch
    %27 = sbr.rel (0) target = $region25
  $region24: #{sage_forward.1} parent=0 // pred_region
    _
  $region25: #{sage_forward.1} parent=0 // pred_fallthru
    _
  // Predicated region
  $region26: #{sage_forward.1} parent=0 // pred_check
    _
  $region27: #{sage_forward.1} parent=0 // pred_check_branch
    %29 = sbr.rel (0) target = $region29
  $region28: #{sage_forward.1} parent=0 // pred_region
    _
  $region29: #{sage_forward.1} parent=0 // pred_fallthru
    _
  // Predicated region
  $region30: #{sage_forward.1} parent=0 // pred_check
    _
  $region31: #{sage_forward.1} parent=0 // pred_check_branch
    %31 = sbr.rel (0) target = $region33
  $region32: #{sage_forward.1} parent=0 // pred_region
    _
  $region33: #{sage_forward.1} parent=0 // pred_fallthru
    _
  // Predicated region
  $region34: #{sage_forward.1} parent=0 // pred_check
    _
  $region35: #{sage_forward.1} parent=0 // pred_check_branch
    %33 = sbr.rel (0) target = $region37
  $region36: #{sage_forward.1} parent=0 // pred_region
    _
  $region37: #{sage_forward.1} parent=0 // pred_fallthru
    _
  // Predicated region
  $region38: #{sage_forward.1} parent=0 // pred_check
    _
  $region39: #{sage_forward.1} parent=0 // pred_check_branch
    %35 = sbr.rel (0) target = $region41
  $region40: #{sage_forward.1} parent=0 // pred_region
    _
  $region41: #{sage_forward.1} parent=0 // pred_fallthru
    _
  // Predicated region
  $region42: #{sage_forward.1} parent=0 // pred_check
    _
  $region43: #{sage_forward.1} parent=0 // pred_check_branch
    %37 = sbr.rel (0) target = $region45
  $region44: #{sage_forward.1} parent=0 // pred_region
    _
  $region45: #{sage_forward.1} parent=0 // pred_fallthru
    _
  %v39 = vld [vmem:[%s0] sm:$0xff]
  %v40 = vld [vmem:[%s0 + $0x8] sm:$0xff]
  %v41 = vld [vmem:[%s0 + $0x10] sm:$0xff]
  %v42 = vld [vmem:[%s0 + $0x18] sm:$0xff]
  %v43 = vld [vmem:[%s0 + $0x20] sm:$0xff]
  %v44 = vld [vmem:[%s0 + $0x28] sm:$0xff]
  %v45 = vld [vmem:[%s0 + $0x30] sm:$0xff]
  %v46 = vld [vmem:[%s0 + $0x38] sm:$0xff]
  %v47 = vld [vmem:[%s0 + $0x40] sm:$0xff]
  %v48 = vld [vmem:[%s0 + $0x48] sm:$0xff]
  %v49 = vld [vmem:[%s0 + $0x50] sm:$0xff]
  %v50 = vld [vmem:[%s0 + $0x58] sm:$0xff]
  %v51 = vld [vmem:[%s0 + $0x60] sm:$0xff]
  %v52 = vld [vmem:[%s0 + $0x68] sm:$0xff]
  %v53 = vld [vmem:[%s0 + $0x70] sm:$0xff]
  %v54 = vld [vmem:[%s0 + $0x78] sm:$0xff]
  %v55 = vld [vmem:[%s0 + $0x80] sm:$0xff]
  %v56 = vld [vmem:[%s0 + $0x88] sm:$0xff]
  %v57 = vld [vmem:[%s0 + $0x90] sm:$0xff]
  %v58 = vld [vmem:[%s0 + $0x98] sm:$0xff]
  %v59 = vld [vmem:[%s0 + $0xa0] sm:$0xff]
  %v60 = vld [vmem:[%s0 + $0xa8] sm:$0xff]
  %v61 = vld [vmem:[%s0 + $0xb0] sm:$0xff]
  %v62 = vld [vmem:[%s0 + $0xb8] sm:$0xff]
  %v63 = vld [vmem:[%s0 + $0xc0] sm:$0xff]
  %v64 = vld [vmem:[%s0 + $0xc8] sm:$0xff]
  %v65 = vld [vmem:[%s0 + $0xd0] sm:$0xff]
  %v66 = vld [vmem:[%s0 + $0xd8] sm:$0xff]
  %v67 = vld [vmem:[%s0 + $0xe0] sm:$0xff]
  %v68 = vld [vmem:[%s0 + $0xe8] sm:$0xff]
  %v69 = vld [vmem:[%s0 + $0xf0] sm:$0xff]
  %v70 = vld [vmem:[%s0 + $0xf8] sm:$0xff]
  %v71 = vld [vmem:[%s1] sm:$0xf]
  %v72 = vld [vmem:[%s1 + $0x4] sm:$0xf]
  %v73 = vld [vmem:[%s1 + $0x8] sm:$0xf]
  %v74 = vld [vmem:[%s1 + $0xc] sm:$0xf]
  %v75 = vld [vmem:[%s1 + $0x10] sm:$0xf]
  %v76 = vld [vmem:[%s1 + $0x14] sm:$0xf]
  %v77 = vld [vmem:[%s1 + $0x18] sm:$0xf]
  %v78 = vld [vmem:[%s1 + $0x1c] sm:$0xf]
  %v79 = vld [vmem:[%s1 + $0x20] sm:$0xf]
  %v80 = vld [vmem:[%s1 + $0x24] sm:$0xf]
  %v81 = vld [vmem:[%s1 + $0x28] sm:$0xf]
  %v82 = vld [vmem:[%s1 + $0x2c] sm:$0xf]
  %v83 = vld [vmem:[%s1 + $0x30] sm:$0xf]
  %v84 = vld [vmem:[%s1 + $0x34] sm:$0xf]
  %v85 = vld [vmem:[%s1 + $0x38] sm:$0xf]
  %v86 = vld [vmem:[%s1 + $0x3c] sm:$0xf]
  %v87 = vld [vmem:[%s1 + $0x40] sm:$0xf]
  %v88 = vld [vmem:[%s1 + $0x44] sm:$0xf]
  %v89 = vld [vmem:[%s1 + $0x48] sm:$0xf]
  %v90 = vld [vmem:[%s1 + $0x4c] sm:$0xf]
  %v91 = vld [vmem:[%s1 + $0x50] sm:$0xf]
  %v92 = vld [vmem:[%s1 + $0x54] sm:$0xf]
  %v93 = vld [vmem:[%s1 + $0x58] sm:$0xf]
  %v94 = vld [vmem:[%s1 + $0x5c] sm:$0xf]
  %v95 = vld [vmem:[%s1 + $0x60] sm:$0xf]
  %v96 = vld [vmem:[%s1 + $0x64] sm:$0xf]
  %v97 = vld [vmem:[%s1 + $0x68] sm:$0xf]
  %v98 = vld [vmem:[%s1 + $0x6c] sm:$0xf]
  %v99 = vld [vmem:[%s1 + $0x70] sm:$0xf]
  %v100 = vld [vmem:[%s1 + $0x74] sm:$0xf]
  %v101 = vld [vmem:[%s1 + $0x78] sm:$0xf]
  %v102 = vld [vmem:[%s1 + $0x7c] sm:$0xf]
  %v103 = vld [vmem:[%s2] sm:$0xf]
  %v104 = vld [vmem:[%s2 + $0x4] sm:$0xf]
  %v105 = vld [vmem:[%s2 + $0x8] sm:$0xf]
  %v106 = vld [vmem:[%s2 + $0xc] sm:$0xf]
  %v107 = vld [vmem:[%s2 + $0x10] sm:$0xf]
  %v108 = vld [vmem:[%s2 + $0x14] sm:$0xf]
  %v109 = vld [vmem:[%s2 + $0x18] sm:$0xf]
  %v110 = vld [vmem:[%s2 + $0x1c] sm:$0xf]
  %v111 = vld [vmem:[%s2 + $0x20] sm:$0xf]
  %v112 = vld [vmem:[%s2 + $0x24] sm:$0xf]
  %v113 = vld [vmem:[%s2 + $0x28] sm:$0xf]
  %v114 = vld [vmem:[%s2 + $0x2c] sm:$0xf]
  %v115 = vld [vmem:[%s2 + $0x30] sm:$0xf]
  %v116 = vld [vmem:[%s2 + $0x34] sm:$0xf]
  %v117 = vld [vmem:[%s2 + $0x38] sm:$0xf]
  %v118 = vld [vmem:[%s2 + $0x3c] sm:$0xf]
  %v119 = vld [vmem:[%s3] sm:$0xf]
  %v120 = vld [vmem:[%s3 + $0x4] sm:$0xf]
  %v121 = vld [vmem:[%s3 + $0x8] sm:$0xf]
  %v122 = vld [vmem:[%s3 + $0xc] sm:$0xf]
  %v123 = vld [vmem:[%s3 + $0x10] sm:$0xf]
  %v124 = vld [vmem:[%s3 + $0x14] sm:$0xf]
  %v125 = vld [vmem:[%s3 + $0x18] sm:$0xf]
  %v126 = vld [vmem:[%s3 + $0x1c] sm:$0xf]
  %v127 = vld [vmem:[%s3 + $0x20] sm:$0xf]
  %v128 = vld [vmem:[%s3 + $0x24] sm:$0xf]
  %v129 = vld [vmem:[%s3 + $0x28] sm:$0xf]
  %v130 = vld [vmem:[%s3 + $0x2c] sm:$0xf]
  %v131 = vld [vmem:[%s3 + $0x30] sm:$0xf]
  %v132 = vld [vmem:[%s3 + $0x34] sm:$0xf]
  %v133 = vld [vmem:[%s3 + $0x38] sm:$0xf]
  %v134 = vld [vmem:[%s3 + $0x3c] sm:$0xf]
  %v135 = vld [vmem:[%s4] sm:$0x1]
  %v168 = vunpack.c.l.b16 %v39
  %v169 = vunpack.c.h.b16 %v39
  %v170 = vunpack.c.l.b16 %v40
  %v171 = vunpack.c.h.b16 %v40
  %v172 = vunpack.c.l.b16 %v41
  %v173 = vunpack.c.h.b16 %v41
  %v174 = vunpack.c.l.b16 %v42
  %v175 = vunpack.c.h.b16 %v42
  %v176 = vunpack.c.l.b16 %v43
  %v177 = vunpack.c.h.b16 %v43
  %v178 = vunpack.c.l.b16 %v44
  %v179 = vunpack.c.h.b16 %v44
  %v180 = vunpack.c.l.b16 %v45
  %v181 = vunpack.c.h.b16 %v45
  %v182 = vunpack.c.l.b16 %v46
  %v183 = vunpack.c.h.b16 %v46
  %v184 = vunpack.c.l.b16 %v47
  %v185 = vunpack.c.h.b16 %v47
  %v186 = vunpack.c.l.b16 %v48
  %v187 = vunpack.c.h.b16 %v48
  %v188 = vunpack.c.l.b16 %v49
  %v189 = vunpack.c.h.b16 %v49
  %v190 = vunpack.c.l.b16 %v50
  %v191 = vunpack.c.h.b16 %v50
  %v192 = vunpack.c.l.b16 %v51
  %v193 = vunpack.c.h.b16 %v51
  %v194 = vunpack.c.l.b16 %v52
  %v195 = vunpack.c.h.b16 %v52
  %v196 = vunpack.c.l.b16 %v53
  %v197 = vunpack.c.h.b16 %v53
  %v198 = vunpack.c.l.b16 %v54
  %v199 = vunpack.c.h.b16 %v54
  %v200 = vunpack.c.l.b16 %v55
  %v201 = vunpack.c.h.b16 %v55
  %v202 = vunpack.c.l.b16 %v56
  %v203 = vunpack.c.h.b16 %v56
  %v204 = vunpack.c.l.b16 %v57
  %v205 = vunpack.c.h.b16 %v57
  %v206 = vunpack.c.l.b16 %v58
  %v207 = vunpack.c.h.b16 %v58
  %v208 = vunpack.c.l.b16 %v59
  %v209 = vunpack.c.h.b16 %v59
  %v210 = vunpack.c.l.b16 %v60
  %v211 = vunpack.c.h.b16 %v60
  %v212 = vunpack.c.l.b16 %v61
  %v213 = vunpack.c.h.b16 %v61
  %v214 = vunpack.c.l.b16 %v62
  %v215 = vunpack.c.h.b16 %v62
  %v216 = vunpack.c.l.b16 %v63
  %v217 = vunpack.c.h.b16 %v63
  %v218 = vunpack.c.l.b16 %v64
  %v219 = vunpack.c.h.b16 %v64
  %v220 = vunpack.c.l.b16 %v65
  %v221 = vunpack.c.h.b16 %v65
  %v222 = vunpack.c.l.b16 %v66
  %v223 = vunpack.c.h.b16 %v66
  %v224 = vunpack.c.l.b16 %v67
  %v225 = vunpack.c.h.b16 %v67
  %v226 = vunpack.c.l.b16 %v68
  %v227 = vunpack.c.h.b16 %v68
  %v228 = vunpack.c.l.b16 %v69
  %v229 = vunpack.c.h.b16 %v69
  %v230 = vunpack.c.l.b16 %v70
  %v231 = vunpack.c.h.b16 %v70
  %v232 = vpack.c.b16 %v170, %v168
  %v233 = vpack.c.b16 %v171, %v169
  %v234 = vpack.c.b16 %v174, %v172
  %v235 = vpack.c.b16 %v175, %v173
  %v236 = vpack.c.b16 %v178, %v176
  %v237 = vpack.c.b16 %v179, %v177
  %v238 = vpack.c.b16 %v182, %v180
  %v239 = vpack.c.b16 %v183, %v181
  %v240 = vpack.c.b16 %v186, %v184
  %v241 = vpack.c.b16 %v187, %v185
  %v242 = vpack.c.b16 %v190, %v188
  %v243 = vpack.c.b16 %v191, %v189
  %v244 = vpack.c.b16 %v194, %v192
  %v245 = vpack.c.b16 %v195, %v193
  %v246 = vpack.c.b16 %v198, %v196
  %v247 = vpack.c.b16 %v199, %v197
  %v248 = vpack.c.b16 %v202, %v200
  %v249 = vpack.c.b16 %v203, %v201
  %v250 = vpack.c.b16 %v206, %v204
  %v251 = vpack.c.b16 %v207, %v205
  %v252 = vpack.c.b16 %v210, %v208
  %v253 = vpack.c.b16 %v211, %v209
  %v254 = vpack.c.b16 %v214, %v212
  %v255 = vpack.c.b16 %v215, %v213
  %v256 = vpack.c.b16 %v218, %v216
  %v257 = vpack.c.b16 %v219, %v217
  %v258 = vpack.c.b16 %v222, %v220
  %v259 = vpack.c.b16 %v223, %v221
  %v260 = vpack.c.b16 %v226, %v224
  %v261 = vpack.c.b16 %v227, %v225
  %v262 = vpack.c.b16 %v230, %v228
  %v263 = vpack.c.b16 %v231, %v229
  %v328 = vunpack.c.l.b16 %v71
  %v329 = vunpack.c.l.b16 %v72
  %v330 = vunpack.c.l.b16 %v73
  %v331 = vunpack.c.l.b16 %v74
  %v332 = vunpack.c.l.b16 %v75
  %v333 = vunpack.c.l.b16 %v76
  %v334 = vunpack.c.l.b16 %v77
  %v335 = vunpack.c.l.b16 %v78
  %v336 = vunpack.c.l.b16 %v79
  %v337 = vunpack.c.l.b16 %v80
  %v338 = vunpack.c.l.b16 %v81
  %v339 = vunpack.c.l.b16 %v82
  %v340 = vunpack.c.l.b16 %v83
  %v341 = vunpack.c.l.b16 %v84
  %v342 = vunpack.c.l.b16 %v85
  %v343 = vunpack.c.l.b16 %v86
  %v344 = vunpack.c.l.b16 %v87
  %v345 = vunpack.c.l.b16 %v88
  %v346 = vunpack.c.l.b16 %v89
  %v347 = vunpack.c.l.b16 %v90
  %v348 = vunpack.c.l.b16 %v91
  %v349 = vunpack.c.l.b16 %v92
  %v350 = vunpack.c.l.b16 %v93
  %v351 = vunpack.c.l.b16 %v94
  %v352 = vunpack.c.l.b16 %v95
  %v353 = vunpack.c.l.b16 %v96
  %v354 = vunpack.c.l.b16 %v97
  %v355 = vunpack.c.l.b16 %v98
  %v356 = vunpack.c.l.b16 %v99
  %v357 = vunpack.c.l.b16 %v100
  %v358 = vunpack.c.l.b16 %v101
  %v359 = vunpack.c.l.b16 %v102
  %v360 = vpack.c.b16 %v329, %v328
  %v361 = vpack.c.b16 %v331, %v330
  %v362 = vpack.c.b16 %v333, %v332
  %v363 = vpack.c.b16 %v335, %v334
  %v364 = vpack.c.b16 %v337, %v336
  %v365 = vpack.c.b16 %v339, %v338
  %v366 = vpack.c.b16 %v341, %v340
  %v367 = vpack.c.b16 %v343, %v342
  %v368 = vpack.c.b16 %v345, %v344
  %v369 = vpack.c.b16 %v347, %v346
  %v370 = vpack.c.b16 %v349, %v348
  %v371 = vpack.c.b16 %v351, %v350
  %v372 = vpack.c.b16 %v353, %v352
  %v373 = vpack.c.b16 %v355, %v354
  %v374 = vpack.c.b16 %v357, %v356
  %v375 = vpack.c.b16 %v359, %v358
  %392 = vmatprep.subr.bf16.mxu0 0
  %393 = vmatpush1.bf16.msra.mxu0 %v360
  %394 = vmatprep.subr.bf16.mxu0 0
  %395 = vmatpush1.bf16.msra.mxu0 %v361
  %396 = vmatprep.subr.bf16.mxu0 0
  %397 = vmatpush1.bf16.msra.mxu0 %v362
  %398 = vmatprep.subr.bf16.mxu0 0
  %399 = vmatpush1.bf16.msra.mxu0 %v363
  %400 = vmatprep.subr.bf16.mxu0 0
  %401 = vmatpush1.bf16.msra.mxu0 %v364
  %402 = vmatprep.subr.bf16.mxu0 0
  %403 = vmatpush1.bf16.msra.mxu0 %v365
  %404 = vmatprep.subr.bf16.mxu0 0
  %405 = vmatpush1.bf16.msra.mxu0 %v366
  %406 = vmatprep.subr.bf16.mxu0 0
  %407 = vmatpush1.bf16.msra.mxu0 %v367
  %408 = vmatprep.subr.bf16.mxu0 0
  %409 = vmatpush1.bf16.msra.mxu0 %v368
  %410 = vmatprep.subr.bf16.mxu0 0
  %411 = vmatpush1.bf16.msra.mxu0 %v369
  %412 = vmatprep.subr.bf16.mxu0 0
  %413 = vmatpush1.bf16.msra.mxu0 %v370
  %414 = vmatprep.subr.bf16.mxu0 0
  %415 = vmatpush1.bf16.msra.mxu0 %v371
  %416 = vmatprep.subr.bf16.mxu0 0
  %417 = vmatpush1.bf16.msra.mxu0 %v372
  %418 = vmatprep.subr.bf16.mxu0 0
  %419 = vmatpush1.bf16.msra.mxu0 %v373
  %420 = vmatprep.subr.bf16.mxu0 0
  %421 = vmatpush1.bf16.msra.mxu0 %v374
  %422 = vmatprep.subr.bf16.mxu0 0
  %423 = vmatpush1.bf16.msra.mxu0 %v375
  %424 = vmatprep.mubr.bf16.mxu0 %v233
  %425 = vmatmul.mubr.bf16.gmra.mrb[0].mxu0 %v232
  %v426 = vpop.f32.mrb[0].mxu0
  %v427 = vadd.f32 0.0, %v426
  %v428 = vpop.f32.mrb[0].mxu0
  %v429 = vpop.f32.mrb[0].mxu0
  %v430 = vadd.f32 0.0, %v429
  %v431 = vpop.f32.mrb[0].mxu0
  %432 = vmatprep.mubr.bf16.mxu0 %v235
  %433 = vmatmul.mubr.bf16.gmra.mrb[0].mxu0 %v234
  %v434 = vpop.f32.mrb[0].mxu0
  %v435 = vadd.f32 0.0, %v434
  %v436 = vpop.f32.mrb[0].mxu0
  %v437 = vpop.f32.mrb[0].mxu0
  %v438 = vadd.f32 0.0, %v437
  %v439 = vpop.f32.mrb[0].mxu0
  %440 = vmatprep.mubr.bf16.mxu0 %v237
  %441 = vmatmul.mubr.bf16.gmra.mrb[0].mxu0 %v236
  %v442 = vpop.f32.mrb[0].mxu0
  %v443 = vadd.f32 0.0, %v442
  %v444 = vpop.f32.mrb[0].mxu0
  %v445 = vpop.f32.mrb[0].mxu0
  %v446 = vadd.f32 0.0, %v445
  %v447 = vpop.f32.mrb[0].mxu0
  %448 = vmatprep.mubr.bf16.mxu0 %v239
  %449 = vmatmul.mubr.bf16.gmra.mrb[0].mxu0 %v238
  %v450 = vpop.f32.mrb[0].mxu0
  %v451 = vadd.f32 0.0, %v450
  %v452 = vpop.f32.mrb[0].mxu0
  %v453 = vpop.f32.mrb[0].mxu0
  %v454 = vadd.f32 0.0, %v453
  %v455 = vpop.f32.mrb[0].mxu0
  %456 = vmatprep.mubr.bf16.mxu0 %v241
  %457 = vmatmul.mubr.bf16.gmra.mrb[0].mxu0 %v240
  %v458 = vpop.f32.mrb[0].mxu0
  %v459 = vadd.f32 0.0, %v458
  %v460 = vpop.f32.mrb[0].mxu0
  %v461 = vpop.f32.mrb[0].mxu0
  %v462 = vadd.f32 0.0, %v461
  %v463 = vpop.f32.mrb[0].mxu0
  %464 = vmatprep.mubr.bf16.mxu0 %v243
  %465 = vmatmul.mubr.bf16.gmra.mrb[0].mxu0 %v242
  %v466 = vpop.f32.mrb[0].mxu0
  %v467 = vadd.f32 0.0, %v466
  %v468 = vpop.f32.mrb[0].mxu0
  %v469 = vpop.f32.mrb[0].mxu0
  %v470 = vadd.f32 0.0, %v469
  %v471 = vpop.f32.mrb[0].mxu0
  %472 = vmatprep.mubr.bf16.mxu0 %v245
  %473 = vmatmul.mubr.bf16.gmra.mrb[0].mxu0 %v244
  %v474 = vpop.f32.mrb[0].mxu0
  %v475 = vadd.f32 0.0, %v474
  %v476 = vpop.f32.mrb[0].mxu0
  %v477 = vpop.f32.mrb[0].mxu0
  %v478 = vadd.f32 0.0, %v477
  %v479 = vpop.f32.mrb[0].mxu0
  %480 = vmatprep.mubr.bf16.mxu0 %v247
  %481 = vmatmul.mubr.bf16.gmra.mrb[0].mxu0 %v246
  %v482 = vpop.f32.mrb[0].mxu0
  %v483 = vadd.f32 0.0, %v482
  %v484 = vpop.f32.mrb[0].mxu0
  %v485 = vpop.f32.mrb[0].mxu0
  %v486 = vadd.f32 0.0, %v485
  %v487 = vpop.f32.mrb[0].mxu0
  %488 = vmatprep.mubr.bf16.mxu0 %v249
  %489 = vmatmul.mubr.bf16.gmra.mrb[0].mxu0 %v248
  %v490 = vpop.f32.mrb[0].mxu0
  %v491 = vadd.f32 0.0, %v490
  %v492 = vpop.f32.mrb[0].mxu0
  %v493 = vpop.f32.mrb[0].mxu0
  %v494 = vadd.f32 0.0, %v493
  %v495 = vpop.f32.mrb[0].mxu0
  %496 = vmatprep.mubr.bf16.mxu0 %v251
  %497 = vmatmul.mubr.bf16.gmra.mrb[0].mxu0 %v250
  %v498 = vpop.f32.mrb[0].mxu0
  %v499 = vadd.f32 0.0, %v498
  %v500 = vpop.f32.mrb[0].mxu0
  %v501 = vpop.f32.mrb[0].mxu0
  %v502 = vadd.f32 0.0, %v501
  %v503 = vpop.f32.mrb[0].mxu0
  %504 = vmatprep.mubr.bf16.mxu0 %v253
  %505 = vmatmul.mubr.bf16.gmra.mrb[0].mxu0 %v252
  %v506 = vpop.f32.mrb[0].mxu0
  %v507 = vadd.f32 0.0, %v506
  %v508 = vpop.f32.mrb[0].mxu0
  %v509 = vpop.f32.mrb[0].mxu0
  %v510 = vadd.f32 0.0, %v509
  %v511 = vpop.f32.mrb[0].mxu0
  %512 = vmatprep.mubr.bf16.mxu0 %v255
  %513 = vmatmul.mubr.bf16.gmra.mrb[0].mxu0 %v254
  %v514 = vpop.f32.mrb[0].mxu0
  %v515 = vadd.f32 0.0, %v514
  %v516 = vpop.f32.mrb[0].mxu0
  %v517 = vpop.f32.mrb[0].mxu0
  %v518 = vadd.f32 0.0, %v517
  %v519 = vpop.f32.mrb[0].mxu0
  %520 = vmatprep.mubr.bf16.mxu0 %v257
  %521 = vmatmul.mubr.bf16.gmra.mrb[0].mxu0 %v256
  %v522 = vpop.f32.mrb[0].mxu0
  %v523 = vadd.f32 0.0, %v522
  %v524 = vpop.f32.mrb[0].mxu0
  %v525 = vpop.f32.mrb[0].mxu0
  %v526 = vadd.f32 0.0, %v525
  %v527 = vpop.f32.mrb[0].mxu0
  %528 = vmatprep.mubr.bf16.mxu0 %v259
  %529 = vmatmul.mubr.bf16.gmra.mrb[0].mxu0 %v258
  %v530 = vpop.f32.mrb[0].mxu0
  %v531 = vadd.f32 0.0, %v530
  %v532 = vpop.f32.mrb[0].mxu0
  %v533 = vpop.f32.mrb[0].mxu0
  %v534 = vadd.f32 0.0, %v533
  %v535 = vpop.f32.mrb[0].mxu0
  %536 = vmatprep.mubr.bf16.mxu0 %v261
  %537 = vmatmul.mubr.bf16.gmra.mrb[0].mxu0 %v260
  %v538 = vpop.f32.mrb[0].mxu0
  %v539 = vadd.f32 0.0, %v538
  %v540 = vpop.f32.mrb[0].mxu0
  %v541 = vpop.f32.mrb[0].mxu0
  %v542 = vadd.f32 0.0, %v541
  %v543 = vpop.f32.mrb[0].mxu0
  %544 = vmatprep.mubr.bf16.mxu0 %v263
  %545 = vmatmul.mubr.bf16.gmra.mrb[0].mxu0 %v262
  %v546 = vpop.f32.mrb[0].mxu0
  %v547 = vadd.f32 0.0, %v546
  %v548 = vpop.f32.mrb[0].mxu0
  %v549 = vpop.f32.mrb[0].mxu0
  %v550 = vadd.f32 0.0, %v549
  %v551 = vpop.f32.mrb[0].mxu0
  %552 = vdwg.mxu0
  %v553 = vpack.c.bf16 %v430, %v427
  %v554 = vpack.c.bf16 %v438, %v435
  %v555 = vpack.c.bf16 %v446, %v443
  %v556 = vpack.c.bf16 %v454, %v451
  %v557 = vpack.c.bf16 %v462, %v459
  %v558 = vpack.c.bf16 %v470, %v467
  %v559 = vpack.c.bf16 %v478, %v475
  %v560 = vpack.c.bf16 %v486, %v483
  %v561 = vpack.c.bf16 %v494, %v491
  %v562 = vpack.c.bf16 %v502, %v499
  %v563 = vpack.c.bf16 %v510, %v507
  %v564 = vpack.c.bf16 %v518, %v515
  %v565 = vpack.c.bf16 %v526, %v523
  %v566 = vpack.c.bf16 %v534, %v531
  %v567 = vpack.c.bf16 %v542, %v539
  %v568 = vpack.c.bf16 %v550, %v547
  %v585 = vunpack.c.l.b16 %v119
  %v586 = vunpack.c.l.b16 %v120
  %v587 = vunpack.c.l.b16 %v121
  %v588 = vunpack.c.l.b16 %v122
  %v589 = vunpack.c.l.b16 %v123
  %v590 = vunpack.c.l.b16 %v124
  %v591 = vunpack.c.l.b16 %v125
  %v592 = vunpack.c.l.b16 %v126
  %v593 = vunpack.c.l.b16 %v127
  %v594 = vunpack.c.l.b16 %v128
  %v595 = vunpack.c.l.b16 %v129
  %v596 = vunpack.c.l.b16 %v130
  %v597 = vunpack.c.l.b16 %v131
  %v598 = vunpack.c.l.b16 %v132
  %v599 = vunpack.c.l.b16 %v133
  %v600 = vunpack.c.l.b16 %v134
  %v601 = vpack.c.b16 %v586, %v585
  %v602 = vpack.c.b16 %v588, %v587
  %v603 = vpack.c.b16 %v590, %v589
  %v604 = vpack.c.b16 %v592, %v591
  %v605 = vpack.c.b16 %v594, %v593
  %v606 = vpack.c.b16 %v596, %v595
  %v607 = vpack.c.b16 %v598, %v597
  %v608 = vpack.c.b16 %v600, %v599
  %617 = vmatprep.subr.bf16.mxu0 0
  %618 = vmatpush1.bf16.msra.mxu0 %v601
  %619 = vmatprep.subr.bf16.mxu0 0
  %620 = vmatpush1.bf16.msra.mxu0 %v602
  %621 = vmatprep.subr.bf16.mxu0 0
  %622 = vmatpush1.bf16.msra.mxu0 %v603
  %623 = vmatprep.subr.bf16.mxu0 0
  %624 = vmatpush1.bf16.msra.mxu0 %v604
  %625 = vmatprep.subr.bf16.mxu0 0
  %626 = vmatpush1.bf16.msra.mxu0 %v605
  %627 = vmatprep.subr.bf16.mxu0 0
  %628 = vmatpush1.bf16.msra.mxu0 %v606
  %629 = vmatprep.subr.bf16.mxu0 0
  %630 = vmatpush1.bf16.msra.mxu0 %v607
  %631 = vmatprep.subr.bf16.mxu0 0
  %632 = vmatpush1.bf16.msra.mxu0 %v608
  %633 = vmatprep.subr.bf16.mxu0 0
  %634 = vmatpush1.bf16.msra.mxu0 0
  %635 = vmatprep.subr.bf16.mxu0 0
  %636 = vmatpush1.bf16.msra.mxu0 0
  %637 = vmatprep.subr.bf16.mxu0 0
  %638 = vmatpush1.bf16.msra.mxu0 0
  %639 = vmatprep.subr.bf16.mxu0 0
  %640 = vmatpush1.bf16.msra.mxu0 0
  %641 = vmatprep.subr.bf16.mxu0 0
  %642 = vmatpush1.bf16.msra.mxu0 0
  %643 = vmatprep.subr.bf16.mxu0 0
  %644 = vmatpush1.bf16.msra.mxu0 0
  %645 = vmatprep.subr.bf16.mxu0 0
  %646 = vmatpush1.bf16.msra.mxu0 0
  %647 = vmatprep.subr.bf16.mxu0 0
  %648 = vmatpush1.bf16.msra.mxu0 0
  %649 = vmatprep.mubr.bf16.mxu0 0
  %650 = vmatmul.mubr.bf16.gmra.mrb[0].mxu0 %v553
  %v651 = vpop.f32.mrb[0].mxu0
  %v652 = vadd.f32 0.0, %v651
  %v653 = vpop.f32.mrb[0].mxu0
  %v654 = vpop.f32.mrb[0].mxu0
  %v655 = vadd.f32 0.0, %v654
  %v656 = vpop.f32.mrb[0].mxu0
  %657 = vmatprep.mubr.bf16.mxu0 0
  %658 = vmatmul.mubr.bf16.gmra.mrb[0].mxu0 %v554
  %v659 = vpop.f32.mrb[0].mxu0
  %v660 = vadd.f32 0.0, %v659
  %v661 = vpop.f32.mrb[0].mxu0
  %v662 = vpop.f32.mrb[0].mxu0
  %v663 = vadd.f32 0.0, %v662
  %v664 = vpop.f32.mrb[0].mxu0
  %665 = vmatprep.mubr.bf16.mxu0 0
  %666 = vmatmul.mubr.bf16.gmra.mrb[0].mxu0 %v555
  %v667 = vpop.f32.mrb[0].mxu0
  %v668 = vadd.f32 0.0, %v667
  %v669 = vpop.f32.mrb[0].mxu0
  %v670 = vpop.f32.mrb[0].mxu0
  %v671 = vadd.f32 0.0, %v670
  %v672 = vpop.f32.mrb[0].mxu0
  %673 = vmatprep.mubr.bf16.mxu0 0
  %674 = vmatmul.mubr.bf16.gmra.mrb[0].mxu0 %v556
  %v675 = vpop.f32.mrb[0].mxu0
  %v676 = vadd.f32 0.0, %v675
  %v677 = vpop.f32.mrb[0].mxu0
  %v678 = vpop.f32.mrb[0].mxu0
  %v679 = vadd.f32 0.0, %v678
  %v680 = vpop.f32.mrb[0].mxu0
  %681 = vmatprep.mubr.bf16.mxu0 0
  %682 = vmatmul.mubr.bf16.gmra.mrb[0].mxu0 %v557
  %v683 = vpop.f32.mrb[0].mxu0
  %v684 = vadd.f32 0.0, %v683
  %v685 = vpop.f32.mrb[0].mxu0
  %v686 = vpop.f32.mrb[0].mxu0
  %v687 = vadd.f32 0.0, %v686
  %v688 = vpop.f32.mrb[0].mxu0
  %689 = vmatprep.mubr.bf16.mxu0 0
  %690 = vmatmul.mubr.bf16.gmra.mrb[0].mxu0 %v558
  %v691 = vpop.f32.mrb[0].mxu0
  %v692 = vadd.f32 0.0, %v691
  %v693 = vpop.f32.mrb[0].mxu0
  %v694 = vpop.f32.mrb[0].mxu0
  %v695 = vadd.f32 0.0, %v694
  %v696 = vpop.f32.mrb[0].mxu0
  %697 = vmatprep.mubr.bf16.mxu0 0
  %698 = vmatmul.mubr.bf16.gmra.mrb[0].mxu0 %v559
  %v699 = vpop.f32.mrb[0].mxu0
  %v700 = vadd.f32 0.0, %v699
  %v701 = vpop.f32.mrb[0].mxu0
  %v702 = vpop.f32.mrb[0].mxu0
  %v703 = vadd.f32 0.0, %v702
  %v704 = vpop.f32.mrb[0].mxu0
  %705 = vmatprep.mubr.bf16.mxu0 0
  %706 = vmatmul.mubr.bf16.gmra.mrb[0].mxu0 %v560
  %v707 = vpop.f32.mrb[0].mxu0
  %v708 = vadd.f32 0.0, %v707
  %v709 = vpop.f32.mrb[0].mxu0
  %v710 = vpop.f32.mrb[0].mxu0
  %v711 = vadd.f32 0.0, %v710
  %v712 = vpop.f32.mrb[0].mxu0
  %713 = vmatprep.mubr.bf16.mxu0 0
  %714 = vmatmul.mubr.bf16.gmra.mrb[0].mxu0 %v561
  %v715 = vpop.f32.mrb[0].mxu0
  %v716 = vadd.f32 0.0, %v715
  %v717 = vpop.f32.mrb[0].mxu0
  %v718 = vpop.f32.mrb[0].mxu0
  %v719 = vadd.f32 0.0, %v718
  %v720 = vpop.f32.mrb[0].mxu0
  %721 = vmatprep.mubr.bf16.mxu0 0
  %722 = vmatmul.mubr.bf16.gmra.mrb[0].mxu0 %v562
  %v723 = vpop.f32.mrb[0].mxu0
  %v724 = vadd.f32 0.0, %v723
  %v725 = vpop.f32.mrb[0].mxu0
  %v726 = vpop.f32.mrb[0].mxu0
  %v727 = vadd.f32 0.0, %v726
  %v728 = vpop.f32.mrb[0].mxu0
  %729 = vmatprep.mubr.bf16.mxu0 0
  %730 = vmatmul.mubr.bf16.gmra.mrb[0].mxu0 %v563
  %v731 = vpop.f32.mrb[0].mxu0
  %v732 = vadd.f32 0.0, %v731
  %v733 = vpop.f32.mrb[0].mxu0
  %v734 = vpop.f32.mrb[0].mxu0
  %v735 = vadd.f32 0.0, %v734
  %v736 = vpop.f32.mrb[0].mxu0
  %737 = vmatprep.mubr.bf16.mxu0 0
  %738 = vmatmul.mubr.bf16.gmra.mrb[0].mxu0 %v564
  %v739 = vpop.f32.mrb[0].mxu0
  %v740 = vadd.f32 0.0, %v739
  %v741 = vpop.f32.mrb[0].mxu0
  %v742 = vpop.f32.mrb[0].mxu0
  %v743 = vadd.f32 0.0, %v742
  %v744 = vpop.f32.mrb[0].mxu0
  %745 = vmatprep.mubr.bf16.mxu0 0
  %746 = vmatmul.mubr.bf16.gmra.mrb[0].mxu0 %v565
  %v747 = vpop.f32.mrb[0].mxu0
  %v748 = vadd.f32 0.0, %v747
  %v749 = vpop.f32.mrb[0].mxu0
  %v750 = vpop.f32.mrb[0].mxu0
  %v751 = vadd.f32 0.0, %v750
  %v752 = vpop.f32.mrb[0].mxu0
  %753 = vmatprep.mubr.bf16.mxu0 0
  %754 = vmatmul.mubr.bf16.gmra.mrb[0].mxu0 %v566
  %v755 = vpop.f32.mrb[0].mxu0
  %v756 = vadd.f32 0.0, %v755
  %v757 = vpop.f32.mrb[0].mxu0
  %v758 = vpop.f32.mrb[0].mxu0
  %v759 = vadd.f32 0.0, %v758
  %v760 = vpop.f32.mrb[0].mxu0
  %761 = vmatprep.mubr.bf16.mxu0 0
  %762 = vmatmul.mubr.bf16.gmra.mrb[0].mxu0 %v567
  %v763 = vpop.f32.mrb[0].mxu0
  %v764 = vadd.f32 0.0, %v763
  %v765 = vpop.f32.mrb[0].mxu0
  %v766 = vpop.f32.mrb[0].mxu0
  %v767 = vadd.f32 0.0, %v766
  %v768 = vpop.f32.mrb[0].mxu0
  %769 = vmatprep.mubr.bf16.mxu0 0
  %770 = vmatmul.mubr.bf16.gmra.mrb[0].mxu0 %v568
  %v771 = vpop.f32.mrb[0].mxu0
  %v772 = vadd.f32 0.0, %v771
  %v773 = vpop.f32.mrb[0].mxu0
  %v774 = vpop.f32.mrb[0].mxu0
  %v775 = vadd.f32 0.0, %v774
  %v776 = vpop.f32.mrb[0].mxu0
  %777 = vdwg.mxu0
  %v794 = vunpack.c.l.b16 %v103
  %v795 = vunpack.c.l.b16 %v104
  %v796 = vunpack.c.l.b16 %v105
  %v797 = vunpack.c.l.b16 %v106
  %v798 = vunpack.c.l.b16 %v107
  %v799 = vunpack.c.l.b16 %v108
  %v800 = vunpack.c.l.b16 %v109
  %v801 = vunpack.c.l.b16 %v110
  %v802 = vunpack.c.l.b16 %v111
  %v803 = vunpack.c.l.b16 %v112
  %v804 = vunpack.c.l.b16 %v113
  %v805 = vunpack.c.l.b16 %v114
  %v806 = vunpack.c.l.b16 %v115
  %v807 = vunpack.c.l.b16 %v116
  %v808 = vunpack.c.l.b16 %v117
  %v809 = vunpack.c.l.b16 %v118
  %v810 = vpack.c.b16 %v795, %v794
  %v811 = vpack.c.b16 %v797, %v796
  %v812 = vpack.c.b16 %v799, %v798
  %v813 = vpack.c.b16 %v801, %v800
  %v814 = vpack.c.b16 %v803, %v802
  %v815 = vpack.c.b16 %v805, %v804
  %v816 = vpack.c.b16 %v807, %v806
  %v817 = vpack.c.b16 %v809, %v808
  %826 = vmatprep.subr.bf16.mxu0 0
  %827 = vmatpush1.bf16.msra.mxu0 %v810
  %828 = vmatprep.subr.bf16.mxu0 0
  %829 = vmatpush1.bf16.msra.mxu0 %v811
  %830 = vmatprep.subr.bf16.mxu0 0
  %831 = vmatpush1.bf16.msra.mxu0 %v812
  %832 = vmatprep.subr.bf16.mxu0 0
  %833 = vmatpush1.bf16.msra.mxu0 %v813
  %834 = vmatprep.subr.bf16.mxu0 0
  %835 = vmatpush1.bf16.msra.mxu0 %v814
  %836 = vmatprep.subr.bf16.mxu0 0
  %837 = vmatpush1.bf16.msra.mxu0 %v815
  %838 = vmatprep.subr.bf16.mxu0 0
  %839 = vmatpush1.bf16.msra.mxu0 %v816
  %840 = vmatprep.subr.bf16.mxu0 0
  %841 = vmatpush1.bf16.msra.mxu0 %v817
  %842 = vmatprep.subr.bf16.mxu0 0
  %843 = vmatpush1.bf16.msra.mxu0 0
  %844 = vmatprep.subr.bf16.mxu0 0
  %845 = vmatpush1.bf16.msra.mxu0 0
  %846 = vmatprep.subr.bf16.mxu0 0
  %847 = vmatpush1.bf16.msra.mxu0 0
  %848 = vmatprep.subr.bf16.mxu0 0
  %849 = vmatpush1.bf16.msra.mxu0 0
  %850 = vmatprep.subr.bf16.mxu0 0
  %851 = vmatpush1.bf16.msra.mxu0 0
  %852 = vmatprep.subr.bf16.mxu0 0
  %853 = vmatpush1.bf16.msra.mxu0 0
  %854 = vmatprep.subr.bf16.mxu0 0
  %855 = vmatpush1.bf16.msra.mxu0 0
  %856 = vmatprep.subr.bf16.mxu0 0
  %857 = vmatpush1.bf16.msra.mxu0 0
  %858 = vmatprep.mubr.bf16.mxu0 0
  %859 = vmatmul.mubr.bf16.gmra.mrb[0].mxu0 %v360
  %v860 = vpop.f32.mrb[0].mxu0
  %v861 = vadd.f32 %v652, %v860
  %v862 = vpop.f32.mrb[0].mxu0
  %v863 = vpop.f32.mrb[0].mxu0
  %v864 = vadd.f32 %v655, %v863
  %v865 = vpop.f32.mrb[0].mxu0
  %866 = vmatprep.mubr.bf16.mxu0 0
  %867 = vmatmul.mubr.bf16.gmra.mrb[0].mxu0 %v361
  %v868 = vpop.f32.mrb[0].mxu0
  %v869 = vadd.f32 %v660, %v868
  %v870 = vpop.f32.mrb[0].mxu0
  %v871 = vpop.f32.mrb[0].mxu0
  %v872 = vadd.f32 %v663, %v871
  %v873 = vpop.f32.mrb[0].mxu0
  %874 = vmatprep.mubr.bf16.mxu0 0
  %875 = vmatmul.mubr.bf16.gmra.mrb[0].mxu0 %v362
  %v876 = vpop.f32.mrb[0].mxu0
  %v877 = vadd.f32 %v668, %v876
  %v878 = vpop.f32.mrb[0].mxu0
  %v879 = vpop.f32.mrb[0].mxu0
  %v880 = vadd.f32 %v671, %v879
  %v881 = vpop.f32.mrb[0].mxu0
  %882 = vmatprep.mubr.bf16.mxu0 0
  %883 = vmatmul.mubr.bf16.gmra.mrb[0].mxu0 %v363
  %v884 = vpop.f32.mrb[0].mxu0
  %v885 = vadd.f32 %v676, %v884
  %v886 = vpop.f32.mrb[0].mxu0
  %v887 = vpop.f32.mrb[0].mxu0
  %v888 = vadd.f32 %v679, %v887
  %v889 = vpop.f32.mrb[0].mxu0
  %890 = vmatprep.mubr.bf16.mxu0 0
  %891 = vmatmul.mubr.bf16.gmra.mrb[0].mxu0 %v364
  %v892 = vpop.f32.mrb[0].mxu0
  %v893 = vadd.f32 %v684, %v892
  %v894 = vpop.f32.mrb[0].mxu0
  %v895 = vpop.f32.mrb[0].mxu0
  %v896 = vadd.f32 %v687, %v895
  %v897 = vpop.f32.mrb[0].mxu0
  %898 = vmatprep.mubr.bf16.mxu0 0
  %899 = vmatmul.mubr.bf16.gmra.mrb[0].mxu0 %v365
  %v900 = vpop.f32.mrb[0].mxu0
  %v901 = vadd.f32 %v692, %v900
  %v902 = vpop.f32.mrb[0].mxu0
  %v903 = vpop.f32.mrb[0].mxu0
  %v904 = vadd.f32 %v695, %v903
  %v905 = vpop.f32.mrb[0].mxu0
  %906 = vmatprep.mubr.bf16.mxu0 0
  %907 = vmatmul.mubr.bf16.gmra.mrb[0].mxu0 %v366
  %v908 = vpop.f32.mrb[0].mxu0
  %v909 = vadd.f32 %v700, %v908
  %v910 = vpop.f32.mrb[0].mxu0
  %v911 = vpop.f32.mrb[0].mxu0
  %v912 = vadd.f32 %v703, %v911
  %v913 = vpop.f32.mrb[0].mxu0
  %914 = vmatprep.mubr.bf16.mxu0 0
  %915 = vmatmul.mubr.bf16.gmra.mrb[0].mxu0 %v367
  %v916 = vpop.f32.mrb[0].mxu0
  %v917 = vadd.f32 %v708, %v916
  %v918 = vpop.f32.mrb[0].mxu0
  %v919 = vpop.f32.mrb[0].mxu0
  %v920 = vadd.f32 %v711, %v919
  %v921 = vpop.f32.mrb[0].mxu0
  %922 = vmatprep.mubr.bf16.mxu0 0
  %923 = vmatmul.mubr.bf16.gmra.mrb[0].mxu0 %v368
  %v924 = vpop.f32.mrb[0].mxu0
  %v925 = vadd.f32 %v716, %v924
  %v926 = vpop.f32.mrb[0].mxu0
  %v927 = vpop.f32.mrb[0].mxu0
  %v928 = vadd.f32 %v719, %v927
  %v929 = vpop.f32.mrb[0].mxu0
  %930 = vmatprep.mubr.bf16.mxu0 0
  %931 = vmatmul.mubr.bf16.gmra.mrb[0].mxu0 %v369
  %v932 = vpop.f32.mrb[0].mxu0
  %v933 = vadd.f32 %v724, %v932
  %v934 = vpop.f32.mrb[0].mxu0
  %v935 = vpop.f32.mrb[0].mxu0
  %v936 = vadd.f32 %v727, %v935
  %v937 = vpop.f32.mrb[0].mxu0
  %938 = vmatprep.mubr.bf16.mxu0 0
  %939 = vmatmul.mubr.bf16.gmra.mrb[0].mxu0 %v370
  %v940 = vpop.f32.mrb[0].mxu0
  %v941 = vadd.f32 %v732, %v940
  %v942 = vpop.f32.mrb[0].mxu0
  %v943 = vpop.f32.mrb[0].mxu0
  %v944 = vadd.f32 %v735, %v943
  %v945 = vpop.f32.mrb[0].mxu0
  %946 = vmatprep.mubr.bf16.mxu0 0
  %947 = vmatmul.mubr.bf16.gmra.mrb[0].mxu0 %v371
  %v948 = vpop.f32.mrb[0].mxu0
  %v949 = vadd.f32 %v740, %v948
  %v950 = vpop.f32.mrb[0].mxu0
  %v951 = vpop.f32.mrb[0].mxu0
  %v952 = vadd.f32 %v743, %v951
  %v953 = vpop.f32.mrb[0].mxu0
  %954 = vmatprep.mubr.bf16.mxu0 0
  %955 = vmatmul.mubr.bf16.gmra.mrb[0].mxu0 %v372
  %v956 = vpop.f32.mrb[0].mxu0
  %v957 = vadd.f32 %v748, %v956
  %v958 = vpop.f32.mrb[0].mxu0
  %v959 = vpop.f32.mrb[0].mxu0
  %v960 = vadd.f32 %v751, %v959
  %v961 = vpop.f32.mrb[0].mxu0
  %962 = vmatprep.mubr.bf16.mxu0 0
  %963 = vmatmul.mubr.bf16.gmra.mrb[0].mxu0 %v373
  %v964 = vpop.f32.mrb[0].mxu0
  %v965 = vadd.f32 %v756, %v964
  %v966 = vpop.f32.mrb[0].mxu0
  %v967 = vpop.f32.mrb[0].mxu0
  %v968 = vadd.f32 %v759, %v967
  %v969 = vpop.f32.mrb[0].mxu0
  %970 = vmatprep.mubr.bf16.mxu0 0
  %971 = vmatmul.mubr.bf16.gmra.mrb[0].mxu0 %v374
  %v972 = vpop.f32.mrb[0].mxu0
  %v973 = vadd.f32 %v764, %v972
  %v974 = vpop.f32.mrb[0].mxu0
  %v975 = vpop.f32.mrb[0].mxu0
  %v976 = vadd.f32 %v767, %v975
  %v977 = vpop.f32.mrb[0].mxu0
  %978 = vmatprep.mubr.bf16.mxu0 0
  %979 = vmatmul.mubr.bf16.gmra.mrb[0].mxu0 %v375
  %v980 = vpop.f32.mrb[0].mxu0
  %v981 = vadd.f32 %v772, %v980
  %v982 = vpop.f32.mrb[0].mxu0
  %v983 = vpop.f32.mrb[0].mxu0
  %v984 = vadd.f32 %v775, %v983
  %v985 = vpop.f32.mrb[0].mxu0
  %986 = vdwg.mxu0
  %v988 = vlaneseq
  %v989 = vshrl.u32 %v988, 7
  %v990 = vsub.s32 0, %v989
  %v991 = vrot.slane %v135, %v990
  %v993 = vadd.f32 %v861, %v991
  %v994 = vadd.f32 %v864, %v991
  %v995 = vadd.f32 %v869, %v991
  %v996 = vadd.f32 %v872, %v991
  %v997 = vadd.f32 %v877, %v991
  %v998 = vadd.f32 %v880, %v991
  %v999 = vadd.f32 %v885, %v991
  %v1000 = vadd.f32 %v888, %v991
  %v1001 = vadd.f32 %v893, %v991
  %v1002 = vadd.f32 %v896, %v991
  %v1003 = vadd.f32 %v901, %v991
  %v1004 = vadd.f32 %v904, %v991
  %v1005 = vadd.f32 %v909, %v991
  %v1006 = vadd.f32 %v912, %v991
  %v1007 = vadd.f32 %v917, %v991
  %v1008 = vadd.f32 %v920, %v991
  %v1009 = vadd.f32 %v925, %v991
  %v1010 = vadd.f32 %v928, %v991
  %v1011 = vadd.f32 %v933, %v991
  %v1012 = vadd.f32 %v936, %v991
  %v1013 = vadd.f32 %v941, %v991
  %v1014 = vadd.f32 %v944, %v991
  %v1015 = vadd.f32 %v949, %v991
  %v1016 = vadd.f32 %v952, %v991
  %v1017 = vadd.f32 %v957, %v991
  %v1018 = vadd.f32 %v960, %v991
  %v1019 = vadd.f32 %v965, %v991
  %v1020 = vadd.f32 %v968, %v991
  %v1021 = vadd.f32 %v973, %v991
  %v1022 = vadd.f32 %v976, %v991
  %v1023 = vadd.f32 %v981, %v991
  %v1024 = vadd.f32 %v984, %v991
  %v1025 = vmax.f32 %v993, 0.0
  %v1026 = vmax.f32 %v994, 0.0
  %v1027 = vmax.f32 %v995, 0.0
  %v1028 = vmax.f32 %v996, 0.0
  %v1029 = vmax.f32 %v997, 0.0
  %v1030 = vmax.f32 %v998, 0.0
  %v1031 = vmax.f32 %v999, 0.0
  %v1032 = vmax.f32 %v1000, 0.0
  %v1033 = vmax.f32 %v1001, 0.0
  %v1034 = vmax.f32 %v1002, 0.0
  %v1035 = vmax.f32 %v1003, 0.0
  %v1036 = vmax.f32 %v1004, 0.0
  %v1037 = vmax.f32 %v1005, 0.0
  %v1038 = vmax.f32 %v1006, 0.0
  %v1039 = vmax.f32 %v1007, 0.0
  %v1040 = vmax.f32 %v1008, 0.0
  %v1041 = vmax.f32 %v1009, 0.0
  %v1042 = vmax.f32 %v1010, 0.0
  %v1043 = vmax.f32 %v1011, 0.0
  %v1044 = vmax.f32 %v1012, 0.0
  %v1045 = vmax.f32 %v1013, 0.0
  %v1046 = vmax.f32 %v1014, 0.0
  %v1047 = vmax.f32 %v1015, 0.0
  %v1048 = vmax.f32 %v1016, 0.0
  %v1049 = vmax.f32 %v1017, 0.0
  %v1050 = vmax.f32 %v1018, 0.0
  %v1051 = vmax.f32 %v1019, 0.0
  %v1052 = vmax.f32 %v1020, 0.0
  %v1053 = vmax.f32 %v1021, 0.0
  %v1054 = vmax.f32 %v1022, 0.0
  %v1055 = vmax.f32 %v1023, 0.0
  %v1056 = vmax.f32 %v1024, 0.0
  %v1057 = vpack.c.bf16 %v1026, %v1025
  %v1058 = vpack.c.bf16 %v1028, %v1027
  %v1059 = vpack.c.bf16 %v1030, %v1029
  %v1060 = vpack.c.bf16 %v1032, %v1031
  %v1061 = vpack.c.bf16 %v1034, %v1033
  %v1062 = vpack.c.bf16 %v1036, %v1035
  %v1063 = vpack.c.bf16 %v1038, %v1037
  %v1064 = vpack.c.bf16 %v1040, %v1039
  %v1065 = vpack.c.bf16 %v1042, %v1041
  %v1066 = vpack.c.bf16 %v1044, %v1043
  %v1067 = vpack.c.bf16 %v1046, %v1045
  %v1068 = vpack.c.bf16 %v1048, %v1047
  %v1069 = vpack.c.bf16 %v1050, %v1049
  %v1070 = vpack.c.bf16 %v1052, %v1051
  %v1071 = vpack.c.bf16 %v1054, %v1053
  %v1072 = vpack.c.bf16 %v1056, %v1055
  %v1073 = vld [vmem:[%s5] sm:$0xf]
  %v1074 = vld [vmem:[%s5 + $0x4] sm:$0xf]
  %v1075 = vld [vmem:[%s5 + $0x8] sm:$0xf]
  %v1076 = vld [vmem:[%s5 + $0xc] sm:$0xf]
  %v1077 = vld [vmem:[%s5 + $0x10] sm:$0xf]
  %v1078 = vld [vmem:[%s5 + $0x14] sm:$0xf]
  %v1079 = vld [vmem:[%s5 + $0x18] sm:$0xf]
  %v1080 = vld [vmem:[%s5 + $0x1c] sm:$0xf]
  %v1081 = vld [vmem:[%s5 + $0x20] sm:$0xf]
  %v1082 = vld [vmem:[%s5 + $0x24] sm:$0xf]
  %v1083 = vld [vmem:[%s5 + $0x28] sm:$0xf]
  %v1084 = vld [vmem:[%s5 + $0x2c] sm:$0xf]
  %v1085 = vld [vmem:[%s5 + $0x30] sm:$0xf]
  %v1086 = vld [vmem:[%s5 + $0x34] sm:$0xf]
  %v1087 = vld [vmem:[%s5 + $0x38] sm:$0xf]
  %v1088 = vld [vmem:[%s5 + $0x3c] sm:$0xf]
  %v1089 = vld [vmem:[%s6] sm:$0xf]
  %v1090 = vld [vmem:[%s6 + $0x4] sm:$0xf]
  %v1091 = vld [vmem:[%s6 + $0x8] sm:$0xf]
  %v1092 = vld [vmem:[%s6 + $0xc] sm:$0xf]
  %v1093 = vld [vmem:[%s6 + $0x10] sm:$0xf]
  %v1094 = vld [vmem:[%s6 + $0x14] sm:$0xf]
  %v1095 = vld [vmem:[%s6 + $0x18] sm:$0xf]
  %v1096 = vld [vmem:[%s6 + $0x1c] sm:$0xf]
  %v1097 = vld [vmem:[%s6 + $0x20] sm:$0xf]
  %v1098 = vld [vmem:[%s6 + $0x24] sm:$0xf]
  %v1099 = vld [vmem:[%s6 + $0x28] sm:$0xf]
  %v1100 = vld [vmem:[%s6 + $0x2c] sm:$0xf]
  %v1101 = vld [vmem:[%s6 + $0x30] sm:$0xf]
  %v1102 = vld [vmem:[%s6 + $0x34] sm:$0xf]
  %v1103 = vld [vmem:[%s6 + $0x38] sm:$0xf]
  %v1104 = vld [vmem:[%s6 + $0x3c] sm:$0xf]
  %v1105 = vld [vmem:[%s7] sm:$0x1]
  %1106 = vmatprep.subr.bf16.mxu0 0
  %1107 = vmatpush1.bf16.msra.mxu0 %v1057
  %1108 = vmatprep.subr.bf16.mxu0 0
  %1109 = vmatpush1.bf16.msra.mxu0 %v1058
  %1110 = vmatprep.subr.bf16.mxu0 0
  %1111 = vmatpush1.bf16.msra.mxu0 %v1059
  %1112 = vmatprep.subr.bf16.mxu0 0
  %1113 = vmatpush1.bf16.msra.mxu0 %v1060
  %1114 = vmatprep.subr.bf16.mxu0 0
  %1115 = vmatpush1.bf16.msra.mxu0 %v1061
  %1116 = vmatprep.subr.bf16.mxu0 0
  %1117 = vmatpush1.bf16.msra.mxu0 %v1062
  %1118 = vmatprep.subr.bf16.mxu0 0
  %1119 = vmatpush1.bf16.msra.mxu0 %v1063
  %1120 = vmatprep.subr.bf16.mxu0 0
  %1121 = vmatpush1.bf16.msra.mxu0 %v1064
  %1122 = vmatprep.subr.bf16.mxu0 0
  %1123 = vmatpush1.bf16.msra.mxu0 %v1065
  %1124 = vmatprep.subr.bf16.mxu0 0
  %1125 = vmatpush1.bf16.msra.mxu0 %v1066
  %1126 = vmatprep.subr.bf16.mxu0 0
  %1127 = vmatpush1.bf16.msra.mxu0 %v1067
  %1128 = vmatprep.subr.bf16.mxu0 0
  %1129 = vmatpush1.bf16.msra.mxu0 %v1068
  %1130 = vmatprep.subr.bf16.mxu0 0
  %1131 = vmatpush1.bf16.msra.mxu0 %v1069
  %1132 = vmatprep.subr.bf16.mxu0 0
  %1133 = vmatpush1.bf16.msra.mxu0 %v1070
  %1134 = vmatprep.subr.bf16.mxu0 0
  %1135 = vmatpush1.bf16.msra.mxu0 %v1071
  %1136 = vmatprep.subr.bf16.mxu0 0
  %1137 = vmatpush1.bf16.msra.mxu0 %v1072
  %1138 = vmatprep.mubr.bf16.mxu0 %v233
  %1139 = vmatmul.mubr.bf16.gmra.mrb[0].mxu0 %v232
  %v1140 = vpop.f32.mrb[0].mxu0
  %v1141 = vadd.f32 0.0, %v1140
  %v1142 = vpop.f32.mrb[0].mxu0
  %v1143 = vpop.f32.mrb[0].mxu0
  %v1144 = vadd.f32 0.0, %v1143
  %v1145 = vpop.f32.mrb[0].mxu0
  %1146 = vmatprep.mubr.bf16.mxu0 %v235
  %1147 = vmatmul.mubr.bf16.gmra.mrb[0].mxu0 %v234
  %v1148 = vpop.f32.mrb[0].mxu0
  %v1149 = vadd.f32 0.0, %v1148
  %v1150 = vpop.f32.mrb[0].mxu0
  %v1151 = vpop.f32.mrb[0].mxu0
  %v1152 = vadd.f32 0.0, %v1151
  %v1153 = vpop.f32.mrb[0].mxu0
  %1154 = vmatprep.mubr.bf16.mxu0 %v237
  %1155 = vmatmul.mubr.bf16.gmra.mrb[0].mxu0 %v236
  %v1156 = vpop.f32.mrb[0].mxu0
  %v1157 = vadd.f32 0.0, %v1156
  %v1158 = vpop.f32.mrb[0].mxu0
  %v1159 = vpop.f32.mrb[0].mxu0
  %v1160 = vadd.f32 0.0, %v1159
  %v1161 = vpop.f32.mrb[0].mxu0
  %1162 = vmatprep.mubr.bf16.mxu0 %v239
  %1163 = vmatmul.mubr.bf16.gmra.mrb[0].mxu0 %v238
  %v1164 = vpop.f32.mrb[0].mxu0
  %v1165 = vadd.f32 0.0, %v1164
  %v1166 = vpop.f32.mrb[0].mxu0
  %v1167 = vpop.f32.mrb[0].mxu0
  %v1168 = vadd.f32 0.0, %v1167
  %v1169 = vpop.f32.mrb[0].mxu0
  %1170 = vmatprep.mubr.bf16.mxu0 %v241
  %1171 = vmatmul.mubr.bf16.gmra.mrb[0].mxu0 %v240
  %v1172 = vpop.f32.mrb[0].mxu0
  %v1173 = vadd.f32 0.0, %v1172
  %v1174 = vpop.f32.mrb[0].mxu0
  %v1175 = vpop.f32.mrb[0].mxu0
  %v1176 = vadd.f32 0.0, %v1175
  %v1177 = vpop.f32.mrb[0].mxu0
  %1178 = vmatprep.mubr.bf16.mxu0 %v243
  %1179 = vmatmul.mubr.bf16.gmra.mrb[0].mxu0 %v242
  %v1180 = vpop.f32.mrb[0].mxu0
  %v1181 = vadd.f32 0.0, %v1180
  %v1182 = vpop.f32.mrb[0].mxu0
  %v1183 = vpop.f32.mrb[0].mxu0
  %v1184 = vadd.f32 0.0, %v1183
  %v1185 = vpop.f32.mrb[0].mxu0
  %1186 = vmatprep.mubr.bf16.mxu0 %v245
  %1187 = vmatmul.mubr.bf16.gmra.mrb[0].mxu0 %v244
  %v1188 = vpop.f32.mrb[0].mxu0
  %v1189 = vadd.f32 0.0, %v1188
  %v1190 = vpop.f32.mrb[0].mxu0
  %v1191 = vpop.f32.mrb[0].mxu0
  %v1192 = vadd.f32 0.0, %v1191
  %v1193 = vpop.f32.mrb[0].mxu0
  %1194 = vmatprep.mubr.bf16.mxu0 %v247
  %1195 = vmatmul.mubr.bf16.gmra.mrb[0].mxu0 %v246
  %v1196 = vpop.f32.mrb[0].mxu0
  %v1197 = vadd.f32 0.0, %v1196
  %v1198 = vpop.f32.mrb[0].mxu0
  %v1199 = vpop.f32.mrb[0].mxu0
  %v1200 = vadd.f32 0.0, %v1199
  %v1201 = vpop.f32.mrb[0].mxu0
  %1202 = vmatprep.mubr.bf16.mxu0 %v249
  %1203 = vmatmul.mubr.bf16.gmra.mrb[0].mxu0 %v248
  %v1204 = vpop.f32.mrb[0].mxu0
  %v1205 = vadd.f32 0.0, %v1204
  %v1206 = vpop.f32.mrb[0].mxu0
  %v1207 = vpop.f32.mrb[0].mxu0
  %v1208 = vadd.f32 0.0, %v1207
  %v1209 = vpop.f32.mrb[0].mxu0
  %1210 = vmatprep.mubr.bf16.mxu0 %v251
  %1211 = vmatmul.mubr.bf16.gmra.mrb[0].mxu0 %v250
  %v1212 = vpop.f32.mrb[0].mxu0
  %v1213 = vadd.f32 0.0, %v1212
  %v1214 = vpop.f32.mrb[0].mxu0
  %v1215 = vpop.f32.mrb[0].mxu0
  %v1216 = vadd.f32 0.0, %v1215
  %v1217 = vpop.f32.mrb[0].mxu0
  %1218 = vmatprep.mubr.bf16.mxu0 %v253
  %1219 = vmatmul.mubr.bf16.gmra.mrb[0].mxu0 %v252
  %v1220 = vpop.f32.mrb[0].mxu0
  %v1221 = vadd.f32 0.0, %v1220
  %v1222 = vpop.f32.mrb[0].mxu0
  %v1223 = vpop.f32.mrb[0].mxu0
  %v1224 = vadd.f32 0.0, %v1223
  %v1225 = vpop.f32.mrb[0].mxu0
  %1226 = vmatprep.mubr.bf16.mxu0 %v255
  %1227 = vmatmul.mubr.bf16.gmra.mrb[0].mxu0 %v254
  %v1228 = vpop.f32.mrb[0].mxu0
  %v1229 = vadd.f32 0.0, %v1228
  %v1230 = vpop.f32.mrb[0].mxu0
  %v1231 = vpop.f32.mrb[0].mxu0
  %v1232 = vadd.f32 0.0, %v1231
  %v1233 = vpop.f32.mrb[0].mxu0
  %1234 = vmatprep.mubr.bf16.mxu0 %v257
  %1235 = vmatmul.mubr.bf16.gmra.mrb[0].mxu0 %v256
  %v1236 = vpop.f32.mrb[0].mxu0
  %v1237 = vadd.f32 0.0, %v1236
  %v1238 = vpop.f32.mrb[0].mxu0
  %v1239 = vpop.f32.mrb[0].mxu0
  %v1240 = vadd.f32 0.0, %v1239
  %v1241 = vpop.f32.mrb[0].mxu0
  %1242 = vmatprep.mubr.bf16.mxu0 %v259
  %1243 = vmatmul.mubr.bf16.gmra.mrb[0].mxu0 %v258
  %v1244 = vpop.f32.mrb[0].mxu0
  %v1245 = vadd.f32 0.0, %v1244
  %v1246 = vpop.f32.mrb[0].mxu0
  %v1247 = vpop.f32.mrb[0].mxu0
  %v1248 = vadd.f32 0.0, %v1247
  %v1249 = vpop.f32.mrb[0].mxu0
  %1250 = vmatprep.mubr.bf16.mxu0 %v261
  %1251 = vmatmul.mubr.bf16.gmra.mrb[0].mxu0 %v260
  %v1252 = vpop.f32.mrb[0].mxu0
  %v1253 = vadd.f32 0.0, %v1252
  %v1254 = vpop.f32.mrb[0].mxu0
  %v1255 = vpop.f32.mrb[0].mxu0
  %v1256 = vadd.f32 0.0, %v1255
  %v1257 = vpop.f32.mrb[0].mxu0
  %1258 = vmatprep.mubr.bf16.mxu0 %v263
  %1259 = vmatmul.mubr.bf16.gmra.mrb[0].mxu0 %v262
  %v1260 = vpop.f32.mrb[0].mxu0
  %v1261 = vadd.f32 0.0, %v1260
  %v1262 = vpop.f32.mrb[0].mxu0
  %v1263 = vpop.f32.mrb[0].mxu0
  %v1264 = vadd.f32 0.0, %v1263
  %v1265 = vpop.f32.mrb[0].mxu0
  %1266 = vdwg.mxu0
  %v1267 = vpack.c.bf16 %v1144, %v1141
  %v1268 = vpack.c.bf16 %v1152, %v1149
  %v1269 = vpack.c.bf16 %v1160, %v1157
  %v1270 = vpack.c.bf16 %v1168, %v1165
  %v1271 = vpack.c.bf16 %v1176, %v1173
  %v1272 = vpack.c.bf16 %v1184, %v1181
  %v1273 = vpack.c.bf16 %v1192, %v1189
  %v1274 = vpack.c.bf16 %v1200, %v1197
  %v1275 = vpack.c.bf16 %v1208, %v1205
  %v1276 = vpack.c.bf16 %v1216, %v1213
  %v1277 = vpack.c.bf16 %v1224, %v1221
  %v1278 = vpack.c.bf16 %v1232, %v1229
  %v1279 = vpack.c.bf16 %v1240, %v1237
  %v1280 = vpack.c.bf16 %v1248, %v1245
  %v1281 = vpack.c.bf16 %v1256, %v1253
  %v1282 = vpack.c.bf16 %v1264, %v1261
  %v1299 = vunpack.c.l.b16 %v1089
  %v1300 = vunpack.c.l.b16 %v1090
  %v1301 = vunpack.c.l.b16 %v1091
  %v1302 = vunpack.c.l.b16 %v1092
  %v1303 = vunpack.c.l.b16 %v1093
  %v1304 = vunpack.c.l.b16 %v1094
  %v1305 = vunpack.c.l.b16 %v1095
  %v1306 = vunpack.c.l.b16 %v1096
  %v1307 = vunpack.c.l.b16 %v1097
  %v1308 = vunpack.c.l.b16 %v1098
  %v1309 = vunpack.c.l.b16 %v1099
  %v1310 = vunpack.c.l.b16 %v1100
  %v1311 = vunpack.c.l.b16 %v1101
  %v1312 = vunpack.c.l.b16 %v1102
  %v1313 = vunpack.c.l.b16 %v1103
  %v1314 = vunpack.c.l.b16 %v1104
  %v1315 = vpack.c.b16 %v1300, %v1299
  %v1316 = vpack.c.b16 %v1302, %v1301
  %v1317 = vpack.c.b16 %v1304, %v1303
  %v1318 = vpack.c.b16 %v1306, %v1305
  %v1319 = vpack.c.b16 %v1308, %v1307
  %v1320 = vpack.c.b16 %v1310, %v1309
  %v1321 = vpack.c.b16 %v1312, %v1311
  %v1322 = vpack.c.b16 %v1314, %v1313
  %1331 = vmatprep.subr.bf16.mxu0 0
  %1332 = vmatpush1.bf16.msra.mxu0 %v1315
  %1333 = vmatprep.subr.bf16.mxu0 0
  %1334 = vmatpush1.bf16.msra.mxu0 %v1316
  %1335 = vmatprep.subr.bf16.mxu0 0
  %1336 = vmatpush1.bf16.msra.mxu0 %v1317
  %1337 = vmatprep.subr.bf16.mxu0 0
  %1338 = vmatpush1.bf16.msra.mxu0 %v1318
  %1339 = vmatprep.subr.bf16.mxu0 0
  %1340 = vmatpush1.bf16.msra.mxu0 %v1319
  %1341 = vmatprep.subr.bf16.mxu0 0
  %1342 = vmatpush1.bf16.msra.mxu0 %v1320
  %1343 = vmatprep.subr.bf16.mxu0 0
  %1344 = vmatpush1.bf16.msra.mxu0 %v1321
  %1345 = vmatprep.subr.bf16.mxu0 0
  %1346 = vmatpush1.bf16.msra.mxu0 %v1322
  %1347 = vmatprep.subr.bf16.mxu0 0
  %1348 = vmatpush1.bf16.msra.mxu0 0
  %1349 = vmatprep.subr.bf16.mxu0 0
  %1350 = vmatpush1.bf16.msra.mxu0 0
  %1351 = vmatprep.subr.bf16.mxu0 0
  %1352 = vmatpush1.bf16.msra.mxu0 0
  %1353 = vmatprep.subr.bf16.mxu0 0
  %1354 = vmatpush1.bf16.msra.mxu0 0
  %1355 = vmatprep.subr.bf16.mxu0 0
  %1356 = vmatpush1.bf16.msra.mxu0 0
  %1357 = vmatprep.subr.bf16.mxu0 0
  %1358 = vmatpush1.bf16.msra.mxu0 0
  %1359 = vmatprep.subr.bf16.mxu0 0
  %1360 = vmatpush1.bf16.msra.mxu0 0
  %1361 = vmatprep.subr.bf16.mxu0 0
  %1362 = vmatpush1.bf16.msra.mxu0 0
  %1363 = vmatprep.mubr.bf16.mxu0 0
  %1364 = vmatmul.mubr.bf16.gmra.mrb[0].mxu0 %v1267
  %v1365 = vpop.f32.mrb[0].mxu0
  %v1366 = vadd.f32 0.0, %v1365
  %v1367 = vpop.f32.mrb[0].mxu0
  %v1368 = vpop.f32.mrb[0].mxu0
  %v1369 = vadd.f32 0.0, %v1368
  %v1370 = vpop.f32.mrb[0].mxu0
  %1371 = vmatprep.mubr.bf16.mxu0 0
  %1372 = vmatmul.mubr.bf16.gmra.mrb[0].mxu0 %v1268
  %v1373 = vpop.f32.mrb[0].mxu0
  %v1374 = vadd.f32 0.0, %v1373
  %v1375 = vpop.f32.mrb[0].mxu0
  %v1376 = vpop.f32.mrb[0].mxu0
  %v1377 = vadd.f32 0.0, %v1376
  %v1378 = vpop.f32.mrb[0].mxu0
  %1379 = vmatprep.mubr.bf16.mxu0 0
  %1380 = vmatmul.mubr.bf16.gmra.mrb[0].mxu0 %v1269
  %v1381 = vpop.f32.mrb[0].mxu0
  %v1382 = vadd.f32 0.0, %v1381
  %v1383 = vpop.f32.mrb[0].mxu0
  %v1384 = vpop.f32.mrb[0].mxu0
  %v1385 = vadd.f32 0.0, %v1384
  %v1386 = vpop.f32.mrb[0].mxu0
  %1387 = vmatprep.mubr.bf16.mxu0 0
  %1388 = vmatmul.mubr.bf16.gmra.mrb[0].mxu0 %v1270
  %v1389 = vpop.f32.mrb[0].mxu0
  %v1390 = vadd.f32 0.0, %v1389
  %v1391 = vpop.f32.mrb[0].mxu0
  %v1392 = vpop.f32.mrb[0].mxu0
  %v1393 = vadd.f32 0.0, %v1392
  %v1394 = vpop.f32.mrb[0].mxu0
  %1395 = vmatprep.mubr.bf16.mxu0 0
  %1396 = vmatmul.mubr.bf16.gmra.mrb[0].mxu0 %v1271
  %v1397 = vpop.f32.mrb[0].mxu0
  %v1398 = vadd.f32 0.0, %v1397
  %v1399 = vpop.f32.mrb[0].mxu0
  %v1400 = vpop.f32.mrb[0].mxu0
  %v1401 = vadd.f32 0.0, %v1400
  %v1402 = vpop.f32.mrb[0].mxu0
  %1403 = vmatprep.mubr.bf16.mxu0 0
  %1404 = vmatmul.mubr.bf16.gmra.mrb[0].mxu0 %v1272
  %v1405 = vpop.f32.mrb[0].mxu0
  %v1406 = vadd.f32 0.0, %v1405
  %v1407 = vpop.f32.mrb[0].mxu0
  %v1408 = vpop.f32.mrb[0].mxu0
  %v1409 = vadd.f32 0.0, %v1408
  %v1410 = vpop.f32.mrb[0].mxu0
  %1411 = vmatprep.mubr.bf16.mxu0 0
  %1412 = vmatmul.mubr.bf16.gmra.mrb[0].mxu0 %v1273
  %v1413 = vpop.f32.mrb[0].mxu0
  %v1414 = vadd.f32 0.0, %v1413
  %v1415 = vpop.f32.mrb[0].mxu0
  %v1416 = vpop.f32.mrb[0].mxu0
  %v1417 = vadd.f32 0.0, %v1416
  %v1418 = vpop.f32.mrb[0].mxu0
  %1419 = vmatprep.mubr.bf16.mxu0 0
  %1420 = vmatmul.mubr.bf16.gmra.mrb[0].mxu0 %v1274
  %v1421 = vpop.f32.mrb[0].mxu0
  %v1422 = vadd.f32 0.0, %v1421
  %v1423 = vpop.f32.mrb[0].mxu0
  %v1424 = vpop.f32.mrb[0].mxu0
  %v1425 = vadd.f32 0.0, %v1424
  %v1426 = vpop.f32.mrb[0].mxu0
  %1427 = vmatprep.mubr.bf16.mxu0 0
  %1428 = vmatmul.mubr.bf16.gmra.mrb[0].mxu0 %v1275
  %v1429 = vpop.f32.mrb[0].mxu0
  %v1430 = vadd.f32 0.0, %v1429
  %v1431 = vpop.f32.mrb[0].mxu0
  %v1432 = vpop.f32.mrb[0].mxu0
  %v1433 = vadd.f32 0.0, %v1432
  %v1434 = vpop.f32.mrb[0].mxu0
  %1435 = vmatprep.mubr.bf16.mxu0 0
  %1436 = vmatmul.mubr.bf16.gmra.mrb[0].mxu0 %v1276
  %v1437 = vpop.f32.mrb[0].mxu0
  %v1438 = vadd.f32 0.0, %v1437
  %v1439 = vpop.f32.mrb[0].mxu0
  %v1440 = vpop.f32.mrb[0].mxu0
  %v1441 = vadd.f32 0.0, %v1440
  %v1442 = vpop.f32.mrb[0].mxu0
  %1443 = vmatprep.mubr.bf16.mxu0 0
  %1444 = vmatmul.mubr.bf16.gmra.mrb[0].mxu0 %v1277
  %v1445 = vpop.f32.mrb[0].mxu0
  %v1446 = vadd.f32 0.0, %v1445
  %v1447 = vpop.f32.mrb[0].mxu0
  %v1448 = vpop.f32.mrb[0].mxu0
  %v1449 = vadd.f32 0.0, %v1448
  %v1450 = vpop.f32.mrb[0].mxu0
  %1451 = vmatprep.mubr.bf16.mxu0 0
  %1452 = vmatmul.mubr.bf16.gmra.mrb[0].mxu0 %v1278
  %v1453 = vpop.f32.mrb[0].mxu0
  %v1454 = vadd.f32 0.0, %v1453
  %v1455 = vpop.f32.mrb[0].mxu0
  %v1456 = vpop.f32.mrb[0].mxu0
  %v1457 = vadd.f32 0.0, %v1456
  %v1458 = vpop.f32.mrb[0].mxu0
  %1459 = vmatprep.mubr.bf16.mxu0 0
  %1460 = vmatmul.mubr.bf16.gmra.mrb[0].mxu0 %v1279
  %v1461 = vpop.f32.mrb[0].mxu0
  %v1462 = vadd.f32 0.0, %v1461
  %v1463 = vpop.f32.mrb[0].mxu0
  %v1464 = vpop.f32.mrb[0].mxu0
  %v1465 = vadd.f32 0.0, %v1464
  %v1466 = vpop.f32.mrb[0].mxu0
  %1467 = vmatprep.mubr.bf16.mxu0 0
  %1468 = vmatmul.mubr.bf16.gmra.mrb[0].mxu0 %v1280
  %v1469 = vpop.f32.mrb[0].mxu0
  %v1470 = vadd.f32 0.0, %v1469
  %v1471 = vpop.f32.mrb[0].mxu0
  %v1472 = vpop.f32.mrb[0].mxu0
  %v1473 = vadd.f32 0.0, %v1472
  %v1474 = vpop.f32.mrb[0].mxu0
  %1475 = vmatprep.mubr.bf16.mxu0 0
  %1476 = vmatmul.mubr.bf16.gmra.mrb[0].mxu0 %v1281
  %v1477 = vpop.f32.mrb[0].mxu0
  %v1478 = vadd.f32 0.0, %v1477
  %v1479 = vpop.f32.mrb[0].mxu0
  %v1480 = vpop.f32.mrb[0].mxu0
  %v1481 = vadd.f32 0.0, %v1480
  %v1482 = vpop.f32.mrb[0].mxu0
  %1483 = vmatprep.mubr.bf16.mxu0 0
  %1484 = vmatmul.mubr.bf16.gmra.mrb[0].mxu0 %v1282
  %v1485 = vpop.f32.mrb[0].mxu0
  %v1486 = vadd.f32 0.0, %v1485
  %v1487 = vpop.f32.mrb[0].mxu0
  %v1488 = vpop.f32.mrb[0].mxu0
  %v1489 = vadd.f32 0.0, %v1488
  %v1490 = vpop.f32.mrb[0].mxu0
  %1491 = vdwg.mxu0
  %v1508 = vunpack.c.l.b16 %v1073
  %v1509 = vunpack.c.l.b16 %v1074
  %v1510 = vunpack.c.l.b16 %v1075
  %v1511 = vunpack.c.l.b16 %v1076
  %v1512 = vunpack.c.l.b16 %v1077
  %v1513 = vunpack.c.l.b16 %v1078
  %v1514 = vunpack.c.l.b16 %v1079
  %v1515 = vunpack.c.l.b16 %v1080
  %v1516 = vunpack.c.l.b16 %v1081
  %v1517 = vunpack.c.l.b16 %v1082
  %v1518 = vunpack.c.l.b16 %v1083
  %v1519 = vunpack.c.l.b16 %v1084
  %v1520 = vunpack.c.l.b16 %v1085
  %v1521 = vunpack.c.l.b16 %v1086
  %v1522 = vunpack.c.l.b16 %v1087
  %v1523 = vunpack.c.l.b16 %v1088
  %v1524 = vpack.c.b16 %v1509, %v1508
  %v1525 = vpack.c.b16 %v1511, %v1510
  %v1526 = vpack.c.b16 %v1513, %v1512
  %v1527 = vpack.c.b16 %v1515, %v1514
  %v1528 = vpack.c.b16 %v1517, %v1516
  %v1529 = vpack.c.b16 %v1519, %v1518
  %v1530 = vpack.c.b16 %v1521, %v1520
  %v1531 = vpack.c.b16 %v1523, %v1522
  %1540 = vmatprep.subr.bf16.mxu0 0
  %1541 = vmatpush1.bf16.msra.mxu0 %v1524
  %1542 = vmatprep.subr.bf16.mxu0 0
  %1543 = vmatpush1.bf16.msra.mxu0 %v1525
  %1544 = vmatprep.subr.bf16.mxu0 0
  %1545 = vmatpush1.bf16.msra.mxu0 %v1526
  %1546 = vmatprep.subr.bf16.mxu0 0
  %1547 = vmatpush1.bf16.msra.mxu0 %v1527
  %1548 = vmatprep.subr.bf16.mxu0 0
  %1549 = vmatpush1.bf16.msra.mxu0 %v1528
  %1550 = vmatprep.subr.bf16.mxu0 0
  %1551 = vmatpush1.bf16.msra.mxu0 %v1529
  %1552 = vmatprep.subr.bf16.mxu0 0
  %1553 = vmatpush1.bf16.msra.mxu0 %v1530
  %1554 = vmatprep.subr.bf16.mxu0 0
  %1555 = vmatpush1.bf16.msra.mxu0 %v1531
  %1556 = vmatprep.subr.bf16.mxu0 0
  %1557 = vmatpush1.bf16.msra.mxu0 0
  %1558 = vmatprep.subr.bf16.mxu0 0
  %1559 = vmatpush1.bf16.msra.mxu0 0
  %1560 = vmatprep.subr.bf16.mxu0 0
  %1561 = vmatpush1.bf16.msra.mxu0 0
  %1562 = vmatprep.subr.bf16.mxu0 0
  %1563 = vmatpush1.bf16.msra.mxu0 0
  %1564 = vmatprep.subr.bf16.mxu0 0
  %1565 = vmatpush1.bf16.msra.mxu0 0
  %1566 = vmatprep.subr.bf16.mxu0 0
  %1567 = vmatpush1.bf16.msra.mxu0 0
  %1568 = vmatprep.subr.bf16.mxu0 0
  %1569 = vmatpush1.bf16.msra.mxu0 0
  %1570 = vmatprep.subr.bf16.mxu0 0
  %1571 = vmatpush1.bf16.msra.mxu0 0
  %1572 = vmatprep.mubr.bf16.mxu0 0
  %1573 = vmatmul.mubr.bf16.gmra.mrb[0].mxu0 %v1057
  %v1574 = vpop.f32.mrb[0].mxu0
  %v1575 = vadd.f32 %v1366, %v1574
  %v1576 = vpop.f32.mrb[0].mxu0
  %v1577 = vpop.f32.mrb[0].mxu0
  %v1578 = vadd.f32 %v1369, %v1577
  %v1579 = vpop.f32.mrb[0].mxu0
  %1580 = vmatprep.mubr.bf16.mxu0 0
  %1581 = vmatmul.mubr.bf16.gmra.mrb[0].mxu0 %v1058
  %v1582 = vpop.f32.mrb[0].mxu0
  %v1583 = vadd.f32 %v1374, %v1582
  %v1584 = vpop.f32.mrb[0].mxu0
  %v1585 = vpop.f32.mrb[0].mxu0
  %v1586 = vadd.f32 %v1377, %v1585
  %v1587 = vpop.f32.mrb[0].mxu0
  %1588 = vmatprep.mubr.bf16.mxu0 0
  %1589 = vmatmul.mubr.bf16.gmra.mrb[0].mxu0 %v1059
  %v1590 = vpop.f32.mrb[0].mxu0
  %v1591 = vadd.f32 %v1382, %v1590
  %v1592 = vpop.f32.mrb[0].mxu0
  %v1593 = vpop.f32.mrb[0].mxu0
  %v1594 = vadd.f32 %v1385, %v1593
  %v1595 = vpop.f32.mrb[0].mxu0
  %1596 = vmatprep.mubr.bf16.mxu0 0
  %1597 = vmatmul.mubr.bf16.gmra.mrb[0].mxu0 %v1060
  %v1598 = vpop.f32.mrb[0].mxu0
  %v1599 = vadd.f32 %v1390, %v1598
  %v1600 = vpop.f32.mrb[0].mxu0
  %v1601 = vpop.f32.mrb[0].mxu0
  %v1602 = vadd.f32 %v1393, %v1601
  %v1603 = vpop.f32.mrb[0].mxu0
  %1604 = vmatprep.mubr.bf16.mxu0 0
  %1605 = vmatmul.mubr.bf16.gmra.mrb[0].mxu0 %v1061
  %v1606 = vpop.f32.mrb[0].mxu0
  %v1607 = vadd.f32 %v1398, %v1606
  %v1608 = vpop.f32.mrb[0].mxu0
  %v1609 = vpop.f32.mrb[0].mxu0
  %v1610 = vadd.f32 %v1401, %v1609
  %v1611 = vpop.f32.mrb[0].mxu0
  %1612 = vmatprep.mubr.bf16.mxu0 0
  %1613 = vmatmul.mubr.bf16.gmra.mrb[0].mxu0 %v1062
  %v1614 = vpop.f32.mrb[0].mxu0
  %v1615 = vadd.f32 %v1406, %v1614
  %v1616 = vpop.f32.mrb[0].mxu0
  %v1617 = vpop.f32.mrb[0].mxu0
  %v1618 = vadd.f32 %v1409, %v1617
  %v1619 = vpop.f32.mrb[0].mxu0
  %1620 = vmatprep.mubr.bf16.mxu0 0
  %1621 = vmatmul.mubr.bf16.gmra.mrb[0].mxu0 %v1063
  %v1622 = vpop.f32.mrb[0].mxu0
  %v1623 = vadd.f32 %v1414, %v1622
  %v1624 = vpop.f32.mrb[0].mxu0
  %v1625 = vpop.f32.mrb[0].mxu0
  %v1626 = vadd.f32 %v1417, %v1625
  %v1627 = vpop.f32.mrb[0].mxu0
  %1628 = vmatprep.mubr.bf16.mxu0 0
  %1629 = vmatmul.mubr.bf16.gmra.mrb[0].mxu0 %v1064
  %v1630 = vpop.f32.mrb[0].mxu0
  %v1631 = vadd.f32 %v1422, %v1630
  %v1632 = vpop.f32.mrb[0].mxu0
  %v1633 = vpop.f32.mrb[0].mxu0
  %v1634 = vadd.f32 %v1425, %v1633
  %v1635 = vpop.f32.mrb[0].mxu0
  %1636 = vmatprep.mubr.bf16.mxu0 0
  %1637 = vmatmul.mubr.bf16.gmra.mrb[0].mxu0 %v1065
  %v1638 = vpop.f32.mrb[0].mxu0
  %v1639 = vadd.f32 %v1430, %v1638
  %v1640 = vpop.f32.mrb[0].mxu0
  %v1641 = vpop.f32.mrb[0].mxu0
  %v1642 = vadd.f32 %v1433, %v1641
  %v1643 = vpop.f32.mrb[0].mxu0
  %1644 = vmatprep.mubr.bf16.mxu0 0
  %1645 = vmatmul.mubr.bf16.gmra.mrb[0].mxu0 %v1066
  %v1646 = vpop.f32.mrb[0].mxu0
  %v1647 = vadd.f32 %v1438, %v1646
  %v1648 = vpop.f32.mrb[0].mxu0
  %v1649 = vpop.f32.mrb[0].mxu0
  %v1650 = vadd.f32 %v1441, %v1649
  %v1651 = vpop.f32.mrb[0].mxu0
  %1652 = vmatprep.mubr.bf16.mxu0 0
  %1653 = vmatmul.mubr.bf16.gmra.mrb[0].mxu0 %v1067
  %v1654 = vpop.f32.mrb[0].mxu0
  %v1655 = vadd.f32 %v1446, %v1654
  %v1656 = vpop.f32.mrb[0].mxu0
  %v1657 = vpop.f32.mrb[0].mxu0
  %v1658 = vadd.f32 %v1449, %v1657
  %v1659 = vpop.f32.mrb[0].mxu0
  %1660 = vmatprep.mubr.bf16.mxu0 0
  %1661 = vmatmul.mubr.bf16.gmra.mrb[0].mxu0 %v1068
  %v1662 = vpop.f32.mrb[0].mxu0
  %v1663 = vadd.f32 %v1454, %v1662
  %v1664 = vpop.f32.mrb[0].mxu0
  %v1665 = vpop.f32.mrb[0].mxu0
  %v1666 = vadd.f32 %v1457, %v1665
  %v1667 = vpop.f32.mrb[0].mxu0
  %1668 = vmatprep.mubr.bf16.mxu0 0
  %1669 = vmatmul.mubr.bf16.gmra.mrb[0].mxu0 %v1069
  %v1670 = vpop.f32.mrb[0].mxu0
  %v1671 = vadd.f32 %v1462, %v1670
  %v1672 = vpop.f32.mrb[0].mxu0
  %v1673 = vpop.f32.mrb[0].mxu0
  %v1674 = vadd.f32 %v1465, %v1673
  %v1675 = vpop.f32.mrb[0].mxu0
  %1676 = vmatprep.mubr.bf16.mxu0 0
  %1677 = vmatmul.mubr.bf16.gmra.mrb[0].mxu0 %v1070
  %v1678 = vpop.f32.mrb[0].mxu0
  %v1679 = vadd.f32 %v1470, %v1678
  %v1680 = vpop.f32.mrb[0].mxu0
  %v1681 = vpop.f32.mrb[0].mxu0
  %v1682 = vadd.f32 %v1473, %v1681
  %v1683 = vpop.f32.mrb[0].mxu0
  %1684 = vmatprep.mubr.bf16.mxu0 0
  %1685 = vmatmul.mubr.bf16.gmra.mrb[0].mxu0 %v1071
  %v1686 = vpop.f32.mrb[0].mxu0
  %v1687 = vadd.f32 %v1478, %v1686
  %v1688 = vpop.f32.mrb[0].mxu0
  %v1689 = vpop.f32.mrb[0].mxu0
  %v1690 = vadd.f32 %v1481, %v1689
  %v1691 = vpop.f32.mrb[0].mxu0
  %1692 = vmatprep.mubr.bf16.mxu0 0
  %1693 = vmatmul.mubr.bf16.gmra.mrb[0].mxu0 %v1072
  %v1694 = vpop.f32.mrb[0].mxu0
  %v1695 = vadd.f32 %v1486, %v1694
  %v1696 = vpop.f32.mrb[0].mxu0
  %v1697 = vpop.f32.mrb[0].mxu0
  %v1698 = vadd.f32 %v1489, %v1697
  %v1699 = vpop.f32.mrb[0].mxu0
  %1700 = vdwg.mxu0
  %v1702 = vlaneseq
  %v1703 = vshrl.u32 %v1702, 7
  %v1704 = vsub.s32 0, %v1703
  %v1705 = vrot.slane %v1105, %v1704
  %v1707 = vadd.f32 %v1575, %v1705
  %v1708 = vadd.f32 %v1578, %v1705
  %v1709 = vadd.f32 %v1583, %v1705
  %v1710 = vadd.f32 %v1586, %v1705
  %v1711 = vadd.f32 %v1591, %v1705
  %v1712 = vadd.f32 %v1594, %v1705
  %v1713 = vadd.f32 %v1599, %v1705
  %v1714 = vadd.f32 %v1602, %v1705
  %v1715 = vadd.f32 %v1607, %v1705
  %v1716 = vadd.f32 %v1610, %v1705
  %v1717 = vadd.f32 %v1615, %v1705
  %v1718 = vadd.f32 %v1618, %v1705
  %v1719 = vadd.f32 %v1623, %v1705
  %v1720 = vadd.f32 %v1626, %v1705
  %v1721 = vadd.f32 %v1631, %v1705
  %v1722 = vadd.f32 %v1634, %v1705
  %v1723 = vadd.f32 %v1639, %v1705
  %v1724 = vadd.f32 %v1642, %v1705
  %v1725 = vadd.f32 %v1647, %v1705
  %v1726 = vadd.f32 %v1650, %v1705
  %v1727 = vadd.f32 %v1655, %v1705
  %v1728 = vadd.f32 %v1658, %v1705
  %v1729 = vadd.f32 %v1663, %v1705
  %v1730 = vadd.f32 %v1666, %v1705
  %v1731 = vadd.f32 %v1671, %v1705
  %v1732 = vadd.f32 %v1674, %v1705
  %v1733 = vadd.f32 %v1679, %v1705
  %v1734 = vadd.f32 %v1682, %v1705
  %v1735 = vadd.f32 %v1687, %v1705
  %v1736 = vadd.f32 %v1690, %v1705
  %v1737 = vadd.f32 %v1695, %v1705
  %v1738 = vadd.f32 %v1698, %v1705
  %v1739 = vmax.f32 %v1707, 0.0
  %v1740 = vmax.f32 %v1708, 0.0
  %v1741 = vmax.f32 %v1709, 0.0
  %v1742 = vmax.f32 %v1710, 0.0
  %v1743 = vmax.f32 %v1711, 0.0
  %v1744 = vmax.f32 %v1712, 0.0
  %v1745 = vmax.f32 %v1713, 0.0
  %v1746 = vmax.f32 %v1714, 0.0
  %v1747 = vmax.f32 %v1715, 0.0
  %v1748 = vmax.f32 %v1716, 0.0
  %v1749 = vmax.f32 %v1717, 0.0
  %v1750 = vmax.f32 %v1718, 0.0
  %v1751 = vmax.f32 %v1719, 0.0
  %v1752 = vmax.f32 %v1720, 0.0
  %v1753 = vmax.f32 %v1721, 0.0
  %v1754 = vmax.f32 %v1722, 0.0
  %v1755 = vmax.f32 %v1723, 0.0
  %v1756 = vmax.f32 %v1724, 0.0
  %v1757 = vmax.f32 %v1725, 0.0
  %v1758 = vmax.f32 %v1726, 0.0
  %v1759 = vmax.f32 %v1727, 0.0
  %v1760 = vmax.f32 %v1728, 0.0
  %v1761 = vmax.f32 %v1729, 0.0
  %v1762 = vmax.f32 %v1730, 0.0
  %v1763 = vmax.f32 %v1731, 0.0
  %v1764 = vmax.f32 %v1732, 0.0
  %v1765 = vmax.f32 %v1733, 0.0
  %v1766 = vmax.f32 %v1734, 0.0
  %v1767 = vmax.f32 %v1735, 0.0
  %v1768 = vmax.f32 %v1736, 0.0
  %v1769 = vmax.f32 %v1737, 0.0
  %v1770 = vmax.f32 %v1738, 0.0
  %v1771 = vpack.c.bf16 %v1740, %v1739
  %v1772 = vpack.c.bf16 %v1742, %v1741
  %v1773 = vpack.c.bf16 %v1744, %v1743
  %v1774 = vpack.c.bf16 %v1746, %v1745
  %v1775 = vpack.c.bf16 %v1748, %v1747
  %v1776 = vpack.c.bf16 %v1750, %v1749
  %v1777 = vpack.c.bf16 %v1752, %v1751
  %v1778 = vpack.c.bf16 %v1754, %v1753
  %v1779 = vpack.c.bf16 %v1756, %v1755
  %v1780 = vpack.c.bf16 %v1758, %v1757
  %v1781 = vpack.c.bf16 %v1760, %v1759
  %v1782 = vpack.c.bf16 %v1762, %v1761
  %v1783 = vpack.c.bf16 %v1764, %v1763
  %v1784 = vpack.c.bf16 %v1766, %v1765
  %v1785 = vpack.c.bf16 %v1768, %v1767
  %v1786 = vpack.c.bf16 %v1770, %v1769
  %v1787 = vld [vmem:[%s8] sm:$0xf]
  %v1788 = vld [vmem:[%s8 + $0x4] sm:$0xf]
  %v1789 = vld [vmem:[%s8 + $0x8] sm:$0xf]
  %v1790 = vld [vmem:[%s8 + $0xc] sm:$0xf]
  %v1791 = vld [vmem:[%s8 + $0x10] sm:$0xf]
  %v1792 = vld [vmem:[%s8 + $0x14] sm:$0xf]
  %v1793 = vld [vmem:[%s8 + $0x18] sm:$0xf]
  %v1794 = vld [vmem:[%s8 + $0x1c] sm:$0xf]
  %v1795 = vld [vmem:[%s8 + $0x20] sm:$0xf]
  %v1796 = vld [vmem:[%s8 + $0x24] sm:$0xf]
  %v1797 = vld [vmem:[%s8 + $0x28] sm:$0xf]
  %v1798 = vld [vmem:[%s8 + $0x2c] sm:$0xf]
  %v1799 = vld [vmem:[%s8 + $0x30] sm:$0xf]
  %v1800 = vld [vmem:[%s8 + $0x34] sm:$0xf]
  %v1801 = vld [vmem:[%s8 + $0x38] sm:$0xf]
  %v1802 = vld [vmem:[%s8 + $0x3c] sm:$0xf]
  %v1803 = vld [vmem:[%s9] sm:$0xf]
  %v1804 = vld [vmem:[%s9 + $0x4] sm:$0xf]
  %v1805 = vld [vmem:[%s9 + $0x8] sm:$0xf]
  %v1806 = vld [vmem:[%s9 + $0xc] sm:$0xf]
  %v1807 = vld [vmem:[%s9 + $0x10] sm:$0xf]
  %v1808 = vld [vmem:[%s9 + $0x14] sm:$0xf]
  %v1809 = vld [vmem:[%s9 + $0x18] sm:$0xf]
  %v1810 = vld [vmem:[%s9 + $0x1c] sm:$0xf]
  %v1811 = vld [vmem:[%s9 + $0x20] sm:$0xf]
  %v1812 = vld [vmem:[%s9 + $0x24] sm:$0xf]
  %v1813 = vld [vmem:[%s9 + $0x28] sm:$0xf]
  %v1814 = vld [vmem:[%s9 + $0x2c] sm:$0xf]
  %v1815 = vld [vmem:[%s9 + $0x30] sm:$0xf]
  %v1816 = vld [vmem:[%s9 + $0x34] sm:$0xf]
  %v1817 = vld [vmem:[%s9 + $0x38] sm:$0xf]
  %v1818 = vld [vmem:[%s9 + $0x3c] sm:$0xf]
  %v1819 = vld [vmem:[%s10] sm:$0x1]
  %1820 = vmatprep.subr.bf16.mxu0 0
  %1821 = vmatpush1.bf16.msra.mxu0 %v1771
  %1822 = vmatprep.subr.bf16.mxu0 0
  %1823 = vmatpush1.bf16.msra.mxu0 %v1772
  %1824 = vmatprep.subr.bf16.mxu0 0
  %1825 = vmatpush1.bf16.msra.mxu0 %v1773
  %1826 = vmatprep.subr.bf16.mxu0 0
  %1827 = vmatpush1.bf16.msra.mxu0 %v1774
  %1828 = vmatprep.subr.bf16.mxu0 0
  %1829 = vmatpush1.bf16.msra.mxu0 %v1775
  %1830 = vmatprep.subr.bf16.mxu0 0
  %1831 = vmatpush1.bf16.msra.mxu0 %v1776
  %1832 = vmatprep.subr.bf16.mxu0 0
  %1833 = vmatpush1.bf16.msra.mxu0 %v1777
  %1834 = vmatprep.subr.bf16.mxu0 0
  %1835 = vmatpush1.bf16.msra.mxu0 %v1778
  %1836 = vmatprep.subr.bf16.mxu0 0
  %1837 = vmatpush1.bf16.msra.mxu0 %v1779
  %1838 = vmatprep.subr.bf16.mxu0 0
  %1839 = vmatpush1.bf16.msra.mxu0 %v1780
  %1840 = vmatprep.subr.bf16.mxu0 0
  %1841 = vmatpush1.bf16.msra.mxu0 %v1781
  %1842 = vmatprep.subr.bf16.mxu0 0
  %1843 = vmatpush1.bf16.msra.mxu0 %v1782
  %1844 = vmatprep.subr.bf16.mxu0 0
  %1845 = vmatpush1.bf16.msra.mxu0 %v1783
  %1846 = vmatprep.subr.bf16.mxu0 0
  %1847 = vmatpush1.bf16.msra.mxu0 %v1784
  %1848 = vmatprep.subr.bf16.mxu0 0
  %1849 = vmatpush1.bf16.msra.mxu0 %v1785
  %1850 = vmatprep.subr.bf16.mxu0 0
  %1851 = vmatpush1.bf16.msra.mxu0 %v1786
  %1852 = vmatprep.mubr.bf16.mxu0 %v233
  %1853 = vmatmul.mubr.bf16.gmra.mrb[0].mxu0 %v232
  %v1854 = vpop.f32.mrb[0].mxu0
  %v1855 = vadd.f32 0.0, %v1854
  %v1856 = vpop.f32.mrb[0].mxu0
  %v1857 = vpop.f32.mrb[0].mxu0
  %v1858 = vadd.f32 0.0, %v1857
  %v1859 = vpop.f32.mrb[0].mxu0
  %1860 = vmatprep.mubr.bf16.mxu0 %v235
  %1861 = vmatmul.mubr.bf16.gmra.mrb[0].mxu0 %v234
  %v1862 = vpop.f32.mrb[0].mxu0
  %v1863 = vadd.f32 0.0, %v1862
  %v1864 = vpop.f32.mrb[0].mxu0
  %v1865 = vpop.f32.mrb[0].mxu0
  %v1866 = vadd.f32 0.0, %v1865
  %v1867 = vpop.f32.mrb[0].mxu0
  %1868 = vmatprep.mubr.bf16.mxu0 %v237
  %1869 = vmatmul.mubr.bf16.gmra.mrb[0].mxu0 %v236
  %v1870 = vpop.f32.mrb[0].mxu0
  %v1871 = vadd.f32 0.0, %v1870
  %v1872 = vpop.f32.mrb[0].mxu0
  %v1873 = vpop.f32.mrb[0].mxu0
  %v1874 = vadd.f32 0.0, %v1873
  %v1875 = vpop.f32.mrb[0].mxu0
  %1876 = vmatprep.mubr.bf16.mxu0 %v239
  %1877 = vmatmul.mubr.bf16.gmra.mrb[0].mxu0 %v238
  %v1878 = vpop.f32.mrb[0].mxu0
  %v1879 = vadd.f32 0.0, %v1878
  %v1880 = vpop.f32.mrb[0].mxu0
  %v1881 = vpop.f32.mrb[0].mxu0
  %v1882 = vadd.f32 0.0, %v1881
  %v1883 = vpop.f32.mrb[0].mxu0
  %1884 = vmatprep.mubr.bf16.mxu0 %v241
  %1885 = vmatmul.mubr.bf16.gmra.mrb[0].mxu0 %v240
  %v1886 = vpop.f32.mrb[0].mxu0
  %v1887 = vadd.f32 0.0, %v1886
  %v1888 = vpop.f32.mrb[0].mxu0
  %v1889 = vpop.f32.mrb[0].mxu0
  %v1890 = vadd.f32 0.0, %v1889
  %v1891 = vpop.f32.mrb[0].mxu0
  %1892 = vmatprep.mubr.bf16.mxu0 %v243
  %1893 = vmatmul.mubr.bf16.gmra.mrb[0].mxu0 %v242
  %v1894 = vpop.f32.mrb[0].mxu0
  %v1895 = vadd.f32 0.0, %v1894
  %v1896 = vpop.f32.mrb[0].mxu0
  %v1897 = vpop.f32.mrb[0].mxu0
  %v1898 = vadd.f32 0.0, %v1897
  %v1899 = vpop.f32.mrb[0].mxu0
  %1900 = vmatprep.mubr.bf16.mxu0 %v245
  %1901 = vmatmul.mubr.bf16.gmra.mrb[0].mxu0 %v244
  %v1902 = vpop.f32.mrb[0].mxu0
  %v1903 = vadd.f32 0.0, %v1902
  %v1904 = vpop.f32.mrb[0].mxu0
  %v1905 = vpop.f32.mrb[0].mxu0
  %v1906 = vadd.f32 0.0, %v1905
  %v1907 = vpop.f32.mrb[0].mxu0
  %1908 = vmatprep.mubr.bf16.mxu0 %v247
  %1909 = vmatmul.mubr.bf16.gmra.mrb[0].mxu0 %v246
  %v1910 = vpop.f32.mrb[0].mxu0
  %v1911 = vadd.f32 0.0, %v1910
  %v1912 = vpop.f32.mrb[0].mxu0
  %v1913 = vpop.f32.mrb[0].mxu0
  %v1914 = vadd.f32 0.0, %v1913
  %v1915 = vpop.f32.mrb[0].mxu0
  %1916 = vmatprep.mubr.bf16.mxu0 %v249
  %1917 = vmatmul.mubr.bf16.gmra.mrb[0].mxu0 %v248
  %v1918 = vpop.f32.mrb[0].mxu0
  %v1919 = vadd.f32 0.0, %v1918
  %v1920 = vpop.f32.mrb[0].mxu0
  %v1921 = vpop.f32.mrb[0].mxu0
  %v1922 = vadd.f32 0.0, %v1921
  %v1923 = vpop.f32.mrb[0].mxu0
  %1924 = vmatprep.mubr.bf16.mxu0 %v251
  %1925 = vmatmul.mubr.bf16.gmra.mrb[0].mxu0 %v250
  %v1926 = vpop.f32.mrb[0].mxu0
  %v1927 = vadd.f32 0.0, %v1926
  %v1928 = vpop.f32.mrb[0].mxu0
  %v1929 = vpop.f32.mrb[0].mxu0
  %v1930 = vadd.f32 0.0, %v1929
  %v1931 = vpop.f32.mrb[0].mxu0
  %1932 = vmatprep.mubr.bf16.mxu0 %v253
  %1933 = vmatmul.mubr.bf16.gmra.mrb[0].mxu0 %v252
  %v1934 = vpop.f32.mrb[0].mxu0
  %v1935 = vadd.f32 0.0, %v1934
  %v1936 = vpop.f32.mrb[0].mxu0
  %v1937 = vpop.f32.mrb[0].mxu0
  %v1938 = vadd.f32 0.0, %v1937
  %v1939 = vpop.f32.mrb[0].mxu0
  %1940 = vmatprep.mubr.bf16.mxu0 %v255
  %1941 = vmatmul.mubr.bf16.gmra.mrb[0].mxu0 %v254
  %v1942 = vpop.f32.mrb[0].mxu0
  %v1943 = vadd.f32 0.0, %v1942
  %v1944 = vpop.f32.mrb[0].mxu0
  %v1945 = vpop.f32.mrb[0].mxu0
  %v1946 = vadd.f32 0.0, %v1945
  %v1947 = vpop.f32.mrb[0].mxu0
  %1948 = vmatprep.mubr.bf16.mxu0 %v257
  %1949 = vmatmul.mubr.bf16.gmra.mrb[0].mxu0 %v256
  %v1950 = vpop.f32.mrb[0].mxu0
  %v1951 = vadd.f32 0.0, %v1950
  %v1952 = vpop.f32.mrb[0].mxu0
  %v1953 = vpop.f32.mrb[0].mxu0
  %v1954 = vadd.f32 0.0, %v1953
  %v1955 = vpop.f32.mrb[0].mxu0
  %1956 = vmatprep.mubr.bf16.mxu0 %v259
  %1957 = vmatmul.mubr.bf16.gmra.mrb[0].mxu0 %v258
  %v1958 = vpop.f32.mrb[0].mxu0
  %v1959 = vadd.f32 0.0, %v1958
  %v1960 = vpop.f32.mrb[0].mxu0
  %v1961 = vpop.f32.mrb[0].mxu0
  %v1962 = vadd.f32 0.0, %v1961
  %v1963 = vpop.f32.mrb[0].mxu0
  %1964 = vmatprep.mubr.bf16.mxu0 %v261
  %1965 = vmatmul.mubr.bf16.gmra.mrb[0].mxu0 %v260
  %v1966 = vpop.f32.mrb[0].mxu0
  %v1967 = vadd.f32 0.0, %v1966
  %v1968 = vpop.f32.mrb[0].mxu0
  %v1969 = vpop.f32.mrb[0].mxu0
  %v1970 = vadd.f32 0.0, %v1969
  %v1971 = vpop.f32.mrb[0].mxu0
  %1972 = vmatprep.mubr.bf16.mxu0 %v263
  %1973 = vmatmul.mubr.bf16.gmra.mrb[0].mxu0 %v262
  %v1974 = vpop.f32.mrb[0].mxu0
  %v1975 = vadd.f32 0.0, %v1974
  %v1976 = vpop.f32.mrb[0].mxu0
  %v1977 = vpop.f32.mrb[0].mxu0
  %v1978 = vadd.f32 0.0, %v1977
  %v1979 = vpop.f32.mrb[0].mxu0
  %1980 = vdwg.mxu0
  %v1981 = vpack.c.bf16 %v1858, %v1855
  %v1982 = vpack.c.bf16 %v1866, %v1863
  %v1983 = vpack.c.bf16 %v1874, %v1871
  %v1984 = vpack.c.bf16 %v1882, %v1879
  %v1985 = vpack.c.bf16 %v1890, %v1887
  %v1986 = vpack.c.bf16 %v1898, %v1895
  %v1987 = vpack.c.bf16 %v1906, %v1903
  %v1988 = vpack.c.bf16 %v1914, %v1911
  %v1989 = vpack.c.bf16 %v1922, %v1919
  %v1990 = vpack.c.bf16 %v1930, %v1927
  %v1991 = vpack.c.bf16 %v1938, %v1935
  %v1992 = vpack.c.bf16 %v1946, %v1943
  %v1993 = vpack.c.bf16 %v1954, %v1951
  %v1994 = vpack.c.bf16 %v1962, %v1959
  %v1995 = vpack.c.bf16 %v1970, %v1967
  %v1996 = vpack.c.bf16 %v1978, %v1975
  %v2013 = vunpack.c.l.b16 %v1803
  %v2014 = vunpack.c.l.b16 %v1804
  %v2015 = vunpack.c.l.b16 %v1805
  %v2016 = vunpack.c.l.b16 %v1806
  %v2017 = vunpack.c.l.b16 %v1807
  %v2018 = vunpack.c.l.b16 %v1808
  %v2019 = vunpack.c.l.b16 %v1809
  %v2020 = vunpack.c.l.b16 %v1810
  %v2021 = vunpack.c.l.b16 %v1811
  %v2022 = vunpack.c.l.b16 %v1812
  %v2023 = vunpack.c.l.b16 %v1813
  %v2024 = vunpack.c.l.b16 %v1814
  %v2025 = vunpack.c.l.b16 %v1815
  %v2026 = vunpack.c.l.b16 %v1816
  %v2027 = vunpack.c.l.b16 %v1817
  %v2028 = vunpack.c.l.b16 %v1818
  %v2029 = vpack.c.b16 %v2014, %v2013
  %v2030 = vpack.c.b16 %v2016, %v2015
  %v2031 = vpack.c.b16 %v2018, %v2017
  %v2032 = vpack.c.b16 %v2020, %v2019
  %v2033 = vpack.c.b16 %v2022, %v2021
  %v2034 = vpack.c.b16 %v2024, %v2023
  %v2035 = vpack.c.b16 %v2026, %v2025
  %v2036 = vpack.c.b16 %v2028, %v2027
  %2045 = vmatprep.subr.bf16.mxu0 0
  %2046 = vmatpush1.bf16.msra.mxu0 %v2029
  %2047 = vmatprep.subr.bf16.mxu0 0
  %2048 = vmatpush1.bf16.msra.mxu0 %v2030
  %2049 = vmatprep.subr.bf16.mxu0 0
  %2050 = vmatpush1.bf16.msra.mxu0 %v2031
  %2051 = vmatprep.subr.bf16.mxu0 0
  %2052 = vmatpush1.bf16.msra.mxu0 %v2032
  %2053 = vmatprep.subr.bf16.mxu0 0
  %2054 = vmatpush1.bf16.msra.mxu0 %v2033
  %2055 = vmatprep.subr.bf16.mxu0 0
  %2056 = vmatpush1.bf16.msra.mxu0 %v2034
  %2057 = vmatprep.subr.bf16.mxu0 0
  %2058 = vmatpush1.bf16.msra.mxu0 %v2035
  %2059 = vmatprep.subr.bf16.mxu0 0
  %2060 = vmatpush1.bf16.msra.mxu0 %v2036
  %2061 = vmatprep.subr.bf16.mxu0 0
  %2062 = vmatpush1.bf16.msra.mxu0 0
  %2063 = vmatprep.subr.bf16.mxu0 0
  %2064 = vmatpush1.bf16.msra.mxu0 0
  %2065 = vmatprep.subr.bf16.mxu0 0
  %2066 = vmatpush1.bf16.msra.mxu0 0
  %2067 = vmatprep.subr.bf16.mxu0 0
  %2068 = vmatpush1.bf16.msra.mxu0 0
  %2069 = vmatprep.subr.bf16.mxu0 0
  %2070 = vmatpush1.bf16.msra.mxu0 0
  %2071 = vmatprep.subr.bf16.mxu0 0
  %2072 = vmatpush1.bf16.msra.mxu0 0
  %2073 = vmatprep.subr.bf16.mxu0 0
  %2074 = vmatpush1.bf16.msra.mxu0 0
  %2075 = vmatprep.subr.bf16.mxu0 0
  %2076 = vmatpush1.bf16.msra.mxu0 0
  %2077 = vmatprep.mubr.bf16.mxu0 0
  %2078 = vmatmul.mubr.bf16.gmra.mrb[0].mxu0 %v1981
  %v2079 = vpop.f32.mrb[0].mxu0
  %v2080 = vadd.f32 0.0, %v2079
  %v2081 = vpop.f32.mrb[0].mxu0
  %v2082 = vpop.f32.mrb[0].mxu0
  %v2083 = vadd.f32 0.0, %v2082
  %v2084 = vpop.f32.mrb[0].mxu0
  %2085 = vmatprep.mubr.bf16.mxu0 0
  %2086 = vmatmul.mubr.bf16.gmra.mrb[0].mxu0 %v1982
  %v2087 = vpop.f32.mrb[0].mxu0
  %v2088 = vadd.f32 0.0, %v2087
  %v2089 = vpop.f32.mrb[0].mxu0
  %v2090 = vpop.f32.mrb[0].mxu0
  %v2091 = vadd.f32 0.0, %v2090
  %v2092 = vpop.f32.mrb[0].mxu0
  %2093 = vmatprep.mubr.bf16.mxu0 0
  %2094 = vmatmul.mubr.bf16.gmra.mrb[0].mxu0 %v1983
  %v2095 = vpop.f32.mrb[0].mxu0
  %v2096 = vadd.f32 0.0, %v2095
  %v2097 = vpop.f32.mrb[0].mxu0
  %v2098 = vpop.f32.mrb[0].mxu0
  %v2099 = vadd.f32 0.0, %v2098
  %v2100 = vpop.f32.mrb[0].mxu0
  %2101 = vmatprep.mubr.bf16.mxu0 0
  %2102 = vmatmul.mubr.bf16.gmra.mrb[0].mxu0 %v1984
  %v2103 = vpop.f32.mrb[0].mxu0
  %v2104 = vadd.f32 0.0, %v2103
  %v2105 = vpop.f32.mrb[0].mxu0
  %v2106 = vpop.f32.mrb[0].mxu0
  %v2107 = vadd.f32 0.0, %v2106
  %v2108 = vpop.f32.mrb[0].mxu0
  %2109 = vmatprep.mubr.bf16.mxu0 0
  %2110 = vmatmul.mubr.bf16.gmra.mrb[0].mxu0 %v1985
  %v2111 = vpop.f32.mrb[0].mxu0
  %v2112 = vadd.f32 0.0, %v2111
  %v2113 = vpop.f32.mrb[0].mxu0
  %v2114 = vpop.f32.mrb[0].mxu0
  %v2115 = vadd.f32 0.0, %v2114
  %v2116 = vpop.f32.mrb[0].mxu0
  %2117 = vmatprep.mubr.bf16.mxu0 0
  %2118 = vmatmul.mubr.bf16.gmra.mrb[0].mxu0 %v1986
  %v2119 = vpop.f32.mrb[0].mxu0
  %v2120 = vadd.f32 0.0, %v2119
  %v2121 = vpop.f32.mrb[0].mxu0
  %v2122 = vpop.f32.mrb[0].mxu0
  %v2123 = vadd.f32 0.0, %v2122
  %v2124 = vpop.f32.mrb[0].mxu0
  %2125 = vmatprep.mubr.bf16.mxu0 0
  %2126 = vmatmul.mubr.bf16.gmra.mrb[0].mxu0 %v1987
  %v2127 = vpop.f32.mrb[0].mxu0
  %v2128 = vadd.f32 0.0, %v2127
  %v2129 = vpop.f32.mrb[0].mxu0
  %v2130 = vpop.f32.mrb[0].mxu0
  %v2131 = vadd.f32 0.0, %v2130
  %v2132 = vpop.f32.mrb[0].mxu0
  %2133 = vmatprep.mubr.bf16.mxu0 0
  %2134 = vmatmul.mubr.bf16.gmra.mrb[0].mxu0 %v1988
  %v2135 = vpop.f32.mrb[0].mxu0
  %v2136 = vadd.f32 0.0, %v2135
  %v2137 = vpop.f32.mrb[0].mxu0
  %v2138 = vpop.f32.mrb[0].mxu0
  %v2139 = vadd.f32 0.0, %v2138
  %v2140 = vpop.f32.mrb[0].mxu0
  %2141 = vmatprep.mubr.bf16.mxu0 0
  %2142 = vmatmul.mubr.bf16.gmra.mrb[0].mxu0 %v1989
  %v2143 = vpop.f32.mrb[0].mxu0
  %v2144 = vadd.f32 0.0, %v2143
  %v2145 = vpop.f32.mrb[0].mxu0
  %v2146 = vpop.f32.mrb[0].mxu0
  %v2147 = vadd.f32 0.0, %v2146
  %v2148 = vpop.f32.mrb[0].mxu0
  %2149 = vmatprep.mubr.bf16.mxu0 0
  %2150 = vmatmul.mubr.bf16.gmra.mrb[0].mxu0 %v1990
  %v2151 = vpop.f32.mrb[0].mxu0
  %v2152 = vadd.f32 0.0, %v2151
  %v2153 = vpop.f32.mrb[0].mxu0
  %v2154 = vpop.f32.mrb[0].mxu0
  %v2155 = vadd.f32 0.0, %v2154
  %v2156 = vpop.f32.mrb[0].mxu0
  %2157 = vmatprep.mubr.bf16.mxu0 0
  %2158 = vmatmul.mubr.bf16.gmra.mrb[0].mxu0 %v1991
  %v2159 = vpop.f32.mrb[0].mxu0
  %v2160 = vadd.f32 0.0, %v2159
  %v2161 = vpop.f32.mrb[0].mxu0
  %v2162 = vpop.f32.mrb[0].mxu0
  %v2163 = vadd.f32 0.0, %v2162
  %v2164 = vpop.f32.mrb[0].mxu0
  %2165 = vmatprep.mubr.bf16.mxu0 0
  %2166 = vmatmul.mubr.bf16.gmra.mrb[0].mxu0 %v1992
  %v2167 = vpop.f32.mrb[0].mxu0
  %v2168 = vadd.f32 0.0, %v2167
  %v2169 = vpop.f32.mrb[0].mxu0
  %v2170 = vpop.f32.mrb[0].mxu0
  %v2171 = vadd.f32 0.0, %v2170
  %v2172 = vpop.f32.mrb[0].mxu0
  %2173 = vmatprep.mubr.bf16.mxu0 0
  %2174 = vmatmul.mubr.bf16.gmra.mrb[0].mxu0 %v1993
  %v2175 = vpop.f32.mrb[0].mxu0
  %v2176 = vadd.f32 0.0, %v2175
  %v2177 = vpop.f32.mrb[0].mxu0
  %v2178 = vpop.f32.mrb[0].mxu0
  %v2179 = vadd.f32 0.0, %v2178
  %v2180 = vpop.f32.mrb[0].mxu0
  %2181 = vmatprep.mubr.bf16.mxu0 0
  %2182 = vmatmul.mubr.bf16.gmra.mrb[0].mxu0 %v1994
  %v2183 = vpop.f32.mrb[0].mxu0
  %v2184 = vadd.f32 0.0, %v2183
  %v2185 = vpop.f32.mrb[0].mxu0
  %v2186 = vpop.f32.mrb[0].mxu0
  %v2187 = vadd.f32 0.0, %v2186
  %v2188 = vpop.f32.mrb[0].mxu0
  %2189 = vmatprep.mubr.bf16.mxu0 0
  %2190 = vmatmul.mubr.bf16.gmra.mrb[0].mxu0 %v1995
  %v2191 = vpop.f32.mrb[0].mxu0
  %v2192 = vadd.f32 0.0, %v2191
  %v2193 = vpop.f32.mrb[0].mxu0
  %v2194 = vpop.f32.mrb[0].mxu0
  %v2195 = vadd.f32 0.0, %v2194
  %v2196 = vpop.f32.mrb[0].mxu0
  %2197 = vmatprep.mubr.bf16.mxu0 0
  %2198 = vmatmul.mubr.bf16.gmra.mrb[0].mxu0 %v1996
  %v2199 = vpop.f32.mrb[0].mxu0
  %v2200 = vadd.f32 0.0, %v2199
  %v2201 = vpop.f32.mrb[0].mxu0
  %v2202 = vpop.f32.mrb[0].mxu0
  %v2203 = vadd.f32 0.0, %v2202
  %v2204 = vpop.f32.mrb[0].mxu0
  %2205 = vdwg.mxu0
  %v2222 = vunpack.c.l.b16 %v1787
  %v2223 = vunpack.c.l.b16 %v1788
  %v2224 = vunpack.c.l.b16 %v1789
  %v2225 = vunpack.c.l.b16 %v1790
  %v2226 = vunpack.c.l.b16 %v1791
  %v2227 = vunpack.c.l.b16 %v1792
  %v2228 = vunpack.c.l.b16 %v1793
  %v2229 = vunpack.c.l.b16 %v1794
  %v2230 = vunpack.c.l.b16 %v1795
  %v2231 = vunpack.c.l.b16 %v1796
  %v2232 = vunpack.c.l.b16 %v1797
  %v2233 = vunpack.c.l.b16 %v1798
  %v2234 = vunpack.c.l.b16 %v1799
  %v2235 = vunpack.c.l.b16 %v1800
  %v2236 = vunpack.c.l.b16 %v1801
  %v2237 = vunpack.c.l.b16 %v1802
  %v2238 = vpack.c.b16 %v2223, %v2222
  %v2239 = vpack.c.b16 %v2225, %v2224
  %v2240 = vpack.c.b16 %v2227, %v2226
  %v2241 = vpack.c.b16 %v2229, %v2228
  %v2242 = vpack.c.b16 %v2231, %v2230
  %v2243 = vpack.c.b16 %v2233, %v2232
  %v2244 = vpack.c.b16 %v2235, %v2234
  %v2245 = vpack.c.b16 %v2237, %v2236
  %2254 = vmatprep.subr.bf16.mxu0 0
  %2255 = vmatpush1.bf16.msra.mxu0 %v2238
  %2256 = vmatprep.subr.bf16.mxu0 0
  %2257 = vmatpush1.bf16.msra.mxu0 %v2239
  %2258 = vmatprep.subr.bf16.mxu0 0
  %2259 = vmatpush1.bf16.msra.mxu0 %v2240
  %2260 = vmatprep.subr.bf16.mxu0 0
  %2261 = vmatpush1.bf16.msra.mxu0 %v2241
  %2262 = vmatprep.subr.bf16.mxu0 0
  %2263 = vmatpush1.bf16.msra.mxu0 %v2242
  %2264 = vmatprep.subr.bf16.mxu0 0
  %2265 = vmatpush1.bf16.msra.mxu0 %v2243
  %2266 = vmatprep.subr.bf16.mxu0 0
  %2267 = vmatpush1.bf16.msra.mxu0 %v2244
  %2268 = vmatprep.subr.bf16.mxu0 0
  %2269 = vmatpush1.bf16.msra.mxu0 %v2245
  %2270 = vmatprep.subr.bf16.mxu0 0
  %2271 = vmatpush1.bf16.msra.mxu0 0
  %2272 = vmatprep.subr.bf16.mxu0 0
  %2273 = vmatpush1.bf16.msra.mxu0 0
  %2274 = vmatprep.subr.bf16.mxu0 0
  %2275 = vmatpush1.bf16.msra.mxu0 0
  %2276 = vmatprep.subr.bf16.mxu0 0
  %2277 = vmatpush1.bf16.msra.mxu0 0
  %2278 = vmatprep.subr.bf16.mxu0 0
  %2279 = vmatpush1.bf16.msra.mxu0 0
  %2280 = vmatprep.subr.bf16.mxu0 0
  %2281 = vmatpush1.bf16.msra.mxu0 0
  %2282 = vmatprep.subr.bf16.mxu0 0
  %2283 = vmatpush1.bf16.msra.mxu0 0
  %2284 = vmatprep.subr.bf16.mxu0 0
  %2285 = vmatpush1.bf16.msra.mxu0 0
  %2286 = vmatprep.mubr.bf16.mxu0 0
  %2287 = vmatmul.mubr.bf16.gmra.mrb[0].mxu0 %v1771
  %v2288 = vpop.f32.mrb[0].mxu0
  %v2289 = vadd.f32 %v2080, %v2288
  %v2290 = vpop.f32.mrb[0].mxu0
  %v2291 = vpop.f32.mrb[0].mxu0
  %v2292 = vadd.f32 %v2083, %v2291
  %v2293 = vpop.f32.mrb[0].mxu0
  %2294 = vmatprep.mubr.bf16.mxu0 0
  %2295 = vmatmul.mubr.bf16.gmra.mrb[0].mxu0 %v1772
  %v2296 = vpop.f32.mrb[0].mxu0
  %v2297 = vadd.f32 %v2088, %v2296
  %v2298 = vpop.f32.mrb[0].mxu0
  %v2299 = vpop.f32.mrb[0].mxu0
  %v2300 = vadd.f32 %v2091, %v2299
  %v2301 = vpop.f32.mrb[0].mxu0
  %2302 = vmatprep.mubr.bf16.mxu0 0
  %2303 = vmatmul.mubr.bf16.gmra.mrb[0].mxu0 %v1773
  %v2304 = vpop.f32.mrb[0].mxu0
  %v2305 = vadd.f32 %v2096, %v2304
  %v2306 = vpop.f32.mrb[0].mxu0
  %v2307 = vpop.f32.mrb[0].mxu0
  %v2308 = vadd.f32 %v2099, %v2307
  %v2309 = vpop.f32.mrb[0].mxu0
  %2310 = vmatprep.mubr.bf16.mxu0 0
  %2311 = vmatmul.mubr.bf16.gmra.mrb[0].mxu0 %v1774
  %v2312 = vpop.f32.mrb[0].mxu0
  %v2313 = vadd.f32 %v2104, %v2312
  %v2314 = vpop.f32.mrb[0].mxu0
  %v2315 = vpop.f32.mrb[0].mxu0
  %v2316 = vadd.f32 %v2107, %v2315
  %v2317 = vpop.f32.mrb[0].mxu0
  %2318 = vmatprep.mubr.bf16.mxu0 0
  %2319 = vmatmul.mubr.bf16.gmra.mrb[0].mxu0 %v1775
  %v2320 = vpop.f32.mrb[0].mxu0
  %v2321 = vadd.f32 %v2112, %v2320
  %v2322 = vpop.f32.mrb[0].mxu0
  %v2323 = vpop.f32.mrb[0].mxu0
  %v2324 = vadd.f32 %v2115, %v2323
  %v2325 = vpop.f32.mrb[0].mxu0
  %2326 = vmatprep.mubr.bf16.mxu0 0
  %2327 = vmatmul.mubr.bf16.gmra.mrb[0].mxu0 %v1776
  %v2328 = vpop.f32.mrb[0].mxu0
  %v2329 = vadd.f32 %v2120, %v2328
  %v2330 = vpop.f32.mrb[0].mxu0
  %v2331 = vpop.f32.mrb[0].mxu0
  %v2332 = vadd.f32 %v2123, %v2331
  %v2333 = vpop.f32.mrb[0].mxu0
  %2334 = vmatprep.mubr.bf16.mxu0 0
  %2335 = vmatmul.mubr.bf16.gmra.mrb[0].mxu0 %v1777
  %v2336 = vpop.f32.mrb[0].mxu0
  %v2337 = vadd.f32 %v2128, %v2336
  %v2338 = vpop.f32.mrb[0].mxu0
  %v2339 = vpop.f32.mrb[0].mxu0
  %v2340 = vadd.f32 %v2131, %v2339
  %v2341 = vpop.f32.mrb[0].mxu0
  %2342 = vmatprep.mubr.bf16.mxu0 0
  %2343 = vmatmul.mubr.bf16.gmra.mrb[0].mxu0 %v1778
  %v2344 = vpop.f32.mrb[0].mxu0
  %v2345 = vadd.f32 %v2136, %v2344
  %v2346 = vpop.f32.mrb[0].mxu0
  %v2347 = vpop.f32.mrb[0].mxu0
  %v2348 = vadd.f32 %v2139, %v2347
  %v2349 = vpop.f32.mrb[0].mxu0
  %2350 = vmatprep.mubr.bf16.mxu0 0
  %2351 = vmatmul.mubr.bf16.gmra.mrb[0].mxu0 %v1779
  %v2352 = vpop.f32.mrb[0].mxu0
  %v2353 = vadd.f32 %v2144, %v2352
  %v2354 = vpop.f32.mrb[0].mxu0
  %v2355 = vpop.f32.mrb[0].mxu0
  %v2356 = vadd.f32 %v2147, %v2355
  %v2357 = vpop.f32.mrb[0].mxu0
  %2358 = vmatprep.mubr.bf16.mxu0 0
  %2359 = vmatmul.mubr.bf16.gmra.mrb[0].mxu0 %v1780
  %v2360 = vpop.f32.mrb[0].mxu0
  %v2361 = vadd.f32 %v2152, %v2360
  %v2362 = vpop.f32.mrb[0].mxu0
  %v2363 = vpop.f32.mrb[0].mxu0
  %v2364 = vadd.f32 %v2155, %v2363
  %v2365 = vpop.f32.mrb[0].mxu0
  %2366 = vmatprep.mubr.bf16.mxu0 0
  %2367 = vmatmul.mubr.bf16.gmra.mrb[0].mxu0 %v1781
  %v2368 = vpop.f32.mrb[0].mxu0
  %v2369 = vadd.f32 %v2160, %v2368
  %v2370 = vpop.f32.mrb[0].mxu0
  %v2371 = vpop.f32.mrb[0].mxu0
  %v2372 = vadd.f32 %v2163, %v2371
  %v2373 = vpop.f32.mrb[0].mxu0
  %2374 = vmatprep.mubr.bf16.mxu0 0
  %2375 = vmatmul.mubr.bf16.gmra.mrb[0].mxu0 %v1782
  %v2376 = vpop.f32.mrb[0].mxu0
  %v2377 = vadd.f32 %v2168, %v2376
  %v2378 = vpop.f32.mrb[0].mxu0
  %v2379 = vpop.f32.mrb[0].mxu0
  %v2380 = vadd.f32 %v2171, %v2379
  %v2381 = vpop.f32.mrb[0].mxu0
  %2382 = vmatprep.mubr.bf16.mxu0 0
  %2383 = vmatmul.mubr.bf16.gmra.mrb[0].mxu0 %v1783
  %v2384 = vpop.f32.mrb[0].mxu0
  %v2385 = vadd.f32 %v2176, %v2384
  %v2386 = vpop.f32.mrb[0].mxu0
  %v2387 = vpop.f32.mrb[0].mxu0
  %v2388 = vadd.f32 %v2179, %v2387
  %v2389 = vpop.f32.mrb[0].mxu0
  %2390 = vmatprep.mubr.bf16.mxu0 0
  %2391 = vmatmul.mubr.bf16.gmra.mrb[0].mxu0 %v1784
  %v2392 = vpop.f32.mrb[0].mxu0
  %v2393 = vadd.f32 %v2184, %v2392
  %v2394 = vpop.f32.mrb[0].mxu0
  %v2395 = vpop.f32.mrb[0].mxu0
  %v2396 = vadd.f32 %v2187, %v2395
  %v2397 = vpop.f32.mrb[0].mxu0
  %2398 = vmatprep.mubr.bf16.mxu0 0
  %2399 = vmatmul.mubr.bf16.gmra.mrb[0].mxu0 %v1785
  %v2400 = vpop.f32.mrb[0].mxu0
  %v2401 = vadd.f32 %v2192, %v2400
  %v2402 = vpop.f32.mrb[0].mxu0
  %v2403 = vpop.f32.mrb[0].mxu0
  %v2404 = vadd.f32 %v2195, %v2403
  %v2405 = vpop.f32.mrb[0].mxu0
  %2406 = vmatprep.mubr.bf16.mxu0 0
  %2407 = vmatmul.mubr.bf16.gmra.mrb[0].mxu0 %v1786
  %v2408 = vpop.f32.mrb[0].mxu0
  %v2409 = vadd.f32 %v2200, %v2408
  %v2410 = vpop.f32.mrb[0].mxu0
  %v2411 = vpop.f32.mrb[0].mxu0
  %v2412 = vadd.f32 %v2203, %v2411
  %v2413 = vpop.f32.mrb[0].mxu0
  %2414 = vdwg.mxu0
  %v2416 = vlaneseq
  %v2417 = vshrl.u32 %v2416, 7
  %v2418 = vsub.s32 0, %v2417
  %v2419 = vrot.slane %v1819, %v2418
  %v2421 = vadd.f32 %v2289, %v2419
  %v2422 = vadd.f32 %v2292, %v2419
  %v2423 = vadd.f32 %v2297, %v2419
  %v2424 = vadd.f32 %v2300, %v2419
  %v2425 = vadd.f32 %v2305, %v2419
  %v2426 = vadd.f32 %v2308, %v2419
  %v2427 = vadd.f32 %v2313, %v2419
  %v2428 = vadd.f32 %v2316, %v2419
  %v2429 = vadd.f32 %v2321, %v2419
  %v2430 = vadd.f32 %v2324, %v2419
  %v2431 = vadd.f32 %v2329, %v2419
  %v2432 = vadd.f32 %v2332, %v2419
  %v2433 = vadd.f32 %v2337, %v2419
  %v2434 = vadd.f32 %v2340, %v2419
  %v2435 = vadd.f32 %v2345, %v2419
  %v2436 = vadd.f32 %v2348, %v2419
  %v2437 = vadd.f32 %v2353, %v2419
  %v2438 = vadd.f32 %v2356, %v2419
  %v2439 = vadd.f32 %v2361, %v2419
  %v2440 = vadd.f32 %v2364, %v2419
  %v2441 = vadd.f32 %v2369, %v2419
  %v2442 = vadd.f32 %v2372, %v2419
  %v2443 = vadd.f32 %v2377, %v2419
  %v2444 = vadd.f32 %v2380, %v2419
  %v2445 = vadd.f32 %v2385, %v2419
  %v2446 = vadd.f32 %v2388, %v2419
  %v2447 = vadd.f32 %v2393, %v2419
  %v2448 = vadd.f32 %v2396, %v2419
  %v2449 = vadd.f32 %v2401, %v2419
  %v2450 = vadd.f32 %v2404, %v2419
  %v2451 = vadd.f32 %v2409, %v2419
  %v2452 = vadd.f32 %v2412, %v2419
  %2453 = vst [vmem:[%s11] sm:$0xff] %v2421
  %2454 = vst [vmem:[%s11 + $0x8] sm:$0xff] %v2422
  %2455 = vst [vmem:[%s11 + $0x10] sm:$0xff] %v2423
  %2456 = vst [vmem:[%s11 + $0x18] sm:$0xff] %v2424
  %2457 = vst [vmem:[%s11 + $0x20] sm:$0xff] %v2425
  %2458 = vst [vmem:[%s11 + $0x28] sm:$0xff] %v2426
  %2459 = vst [vmem:[%s11 + $0x30] sm:$0xff] %v2427
  %2460 = vst [vmem:[%s11 + $0x38] sm:$0xff] %v2428
  %2461 = vst [vmem:[%s11 + $0x40] sm:$0xff] %v2429
  %2462 = vst [vmem:[%s11 + $0x48] sm:$0xff] %v2430
  %2463 = vst [vmem:[%s11 + $0x50] sm:$0xff] %v2431
  %2464 = vst [vmem:[%s11 + $0x58] sm:$0xff] %v2432
  %2465 = vst [vmem:[%s11 + $0x60] sm:$0xff] %v2433
  %2466 = vst [vmem:[%s11 + $0x68] sm:$0xff] %v2434
  %2467 = vst [vmem:[%s11 + $0x70] sm:$0xff] %v2435
  %2468 = vst [vmem:[%s11 + $0x78] sm:$0xff] %v2436
  %2469 = vst [vmem:[%s11 + $0x80] sm:$0xff] %v2437
  %2470 = vst [vmem:[%s11 + $0x88] sm:$0xff] %v2438
  %2471 = vst [vmem:[%s11 + $0x90] sm:$0xff] %v2439
  %2472 = vst [vmem:[%s11 + $0x98] sm:$0xff] %v2440
  %2473 = vst [vmem:[%s11 + $0xa0] sm:$0xff] %v2441
  %2474 = vst [vmem:[%s11 + $0xa8] sm:$0xff] %v2442
  %2475 = vst [vmem:[%s11 + $0xb0] sm:$0xff] %v2443
  %2476 = vst [vmem:[%s11 + $0xb8] sm:$0xff] %v2444
  %2477 = vst [vmem:[%s11 + $0xc0] sm:$0xff] %v2445
  %2478 = vst [vmem:[%s11 + $0xc8] sm:$0xff] %v2446
  %2479 = vst [vmem:[%s11 + $0xd0] sm:$0xff] %v2447
  %2480 = vst [vmem:[%s11 + $0xd8] sm:$0xff] %v2448
  %2481 = vst [vmem:[%s11 + $0xe0] sm:$0xff] %v2449
  %2482 = vst [vmem:[%s11 + $0xe8] sm:$0xff] %v2450
  %2483 = vst [vmem:[%s11 + $0xf0] sm:$0xff] %v2451
  %2484 = vst [vmem:[%s11 + $0xf8] sm:$0xff] %v2452
  // Predicated region
  $region46: #{sage_forward.1} parent=0 // pred_check
    _
  $region47: #{sage_forward.1} parent=0 // pred_check_branch
    %2486 = sbr.rel (0) target = $region49
  $region48: #{sage_forward.1} parent=0 // pred_region
    _
  $region49: #{sage_forward.1} parent=0 // pred_fallthru
    _
  // Predicated region
  $region50: #{sage_forward.1} parent=0 // pred_check
    _
  $region51: #{sage_forward.1} parent=0 // pred_check_branch
    %2488 = sbr.rel (0) target = $region53
  $region52: #{sage_forward.1} parent=0 // pred_region
    _
  $region53: #{sage_forward.1} parent=0 // pred_fallthru
    _

</llo_original>
